<compile_context>
chip_gen: v5e
topology: v5e:2x2
jax: 0.10.0
libtpu: 0.0.40
codegen_flags: <defaults>
</compile_context>

<pallas_src>
import jax
import jax.numpy as jnp
import numpy as np
from jax.experimental import pallas as pl
from jax.experimental.pallas import tpu as pltpu

EPS = 1e-5


# ----------------------------------------------------------------------------
# Pass B: BN2 batch statistics of h = Conv1x1(ReLU(BN1(x))).
# Per-image block (Cin, H*W): channels on sublanes, spatial on lanes
# (lane-dense).  (C2,1) accumulators stay resident across the grid axis.
# ----------------------------------------------------------------------------
def _h_stats_kernel(x_ref, s1_ref, t1_ref, w1t_ref, sum_ref, sq_ref):
    @pl.when(pl.program_id(0) == 0)
    def _init():
        sum_ref[...] = jnp.zeros_like(sum_ref)
        sq_ref[...] = jnp.zeros_like(sq_ref)

    x = x_ref[...].astype(jnp.float32)                       # (Cin, HW)
    a1 = jnp.maximum(x * s1_ref[...] + t1_ref[...], 0.0)     # BN1 + ReLU
    hmat = jnp.dot(w1t_ref[...], a1.astype(jnp.bfloat16),
                   preferred_element_type=jnp.float32)       # (C2, HW)
    sum_ref[...] += jnp.sum(hmat, axis=1, keepdims=True)
    sq_ref[...] += jnp.sum(hmat * hmat, axis=1, keepdims=True)


def _h_stats(x3, s1, t1, w1t_bf):
    n, cin, hw = x3.shape
    c2 = w1t_bf.shape[0]
    # TODO(synk): for very large H*W add a second ("arbitrary") grid axis that
    # tiles the spatial lanes; also foldable into pass C behind a phase axis.
    return pl.pallas_call(
        _h_stats_kernel,
        out_shape=(jax.ShapeDtypeStruct((c2, 1), jnp.float32),
                   jax.ShapeDtypeStruct((c2, 1), jnp.float32)),
        grid=(n,),
        in_specs=[
            pl.BlockSpec((None, cin, hw), lambda i: (i, 0, 0)),
            pl.BlockSpec((cin, 1), lambda i: (0, 0)),
            pl.BlockSpec((cin, 1), lambda i: (0, 0)),
            pl.BlockSpec((c2, cin), lambda i: (0, 0)),
        ],
        out_specs=(pl.BlockSpec((c2, 1), lambda i: (0, 0)),
                   pl.BlockSpec((c2, 1), lambda i: (0, 0))),
        compiler_params=pltpu.CompilerParams(
            dimension_semantics=("arbitrary",)),
    )(x3, s1, t1, w1t_bf)


# ----------------------------------------------------------------------------
# Pass C: fused BN1->ReLU->1x1 conv->BN2->ReLU->3x3 conv + channel concat,
# one image per grid step ("parallel" axis).  The 3x3 conv is a single
# 9*C2-deep MXU matmul built from 9 lane-shifted slices of a zero-ringed,
# flattened padded a2 scratch (bf16).
# ----------------------------------------------------------------------------
def _fused_pass(x3, s1, t1, s2, t2, w1t_bf, w2r_bf, h, w):
    n, cin, hw = x3.shape
    c2 = w1t_bf.shape[0]
    kk = w2r_bf.shape[0]
    hp, wp = h + 2, w + 2
    lq = h * wp                                   # matmul output columns
    lpad = ((max(hp * wp, 2 * wp + 2 + lq) + 127) // 128) * 128

    def kernel(x_ref, s1_ref, t1_ref, s2_ref, t2_ref, w1t_ref, w2r_ref,
               o_ref, a2p_ref, rhs_ref):
        # BN1 -> ReLU -> 1x1 conv -> BN2 -> ReLU  (channels-first, lane-dense)
        x = x_ref[...].astype(jnp.float32)                    # (Cin, HW)
        a1 = jnp.maximum(x * s1_ref[...] + t1_ref[...], 0.0)
        hmat = jnp.dot(w1t_ref[...], a1.astype(jnp.bfloat16),
                       preferred_element_type=jnp.float32)    # (C2, HW)
        a2 = jnp.maximum(hmat * s2_ref[...] + t2_ref[...], 0.0)
        a2 = a2.astype(jnp.bfloat16)                           # (C2, HW)

        # Embed a2 into the flattened padded grid; ring + tail stay zero,
        # which is exactly Conv2d(padding=1)'s zero padding.
        a2p_ref[...] = jnp.zeros((c2, lpad), jnp.bfloat16)
        for i in range(h):
            dst = (i + 1) * wp + 1
            a2p_ref[:, dst:dst + w] = a2[:, i * w:(i + 1) * w]

        # Stack the 9 shifted taps along the contraction dim (depth 9*C2).
        for di in range(3):
            for dj in range(3):
                t_idx = di * 3 + dj
                off = di * wp + dj
                rhs_ref[t_idx * c2:(t_idx + 1) * c2, :] = \
                    a2p_ref[:, off:off + lq]

        # One deep MXU matmul: (K, 9*C2) @ (9*C2, Lq) -> (K, Lq), lane-dense.
        outp = jnp.dot(w2r_ref[...], rhs_ref[...],
                       preferred_element_type=jnp.float32)

        # Write straight into the concatenated output block (no XLA concat).
        o_ref[0:cin, :] = x.astype(o_ref.dtype)
        for i in range(h):
            o_ref[cin:cin + kk, i * w:(i + 1) * w] = \
                outp[:, i * wp:i * wp + w].astype(o_ref.dtype)

    # TODO(synk): for large H*W tile spatially (row blocks with a 1-row halo);
    # for tiny N pack several images per grid step so each core gets >=2 steps.
    return pl.pallas_call(
        kernel,
        out_shape=jax.ShapeDtypeStruct((n, cin + kk, hw), jnp.float32),
        grid=(n,),
        in_specs=[
            pl.BlockSpec((None, cin, hw), lambda i: (i, 0, 0)),
            pl.BlockSpec((cin, 1), lambda i: (0, 0)),
            pl.BlockSpec((cin, 1), lambda i: (0, 0)),
            pl.BlockSpec((c2, 1), lambda i: (0, 0)),
            pl.BlockSpec((c2, 1), lambda i: (0, 0)),
            pl.BlockSpec((c2, cin), lambda i: (0, 0)),
            pl.BlockSpec((kk, 9 * c2), lambda i: (0, 0)),
        ],
        out_specs=pl.BlockSpec((None, cin + kk, hw), lambda i: (i, 0, 0)),
        scratch_shapes=[pltpu.VMEM((c2, lpad), jnp.bfloat16),
                        pltpu.VMEM((9 * c2, lq), jnp.bfloat16)],
        compiler_params=pltpu.CompilerParams(
            dimension_semantics=("parallel",)),
    )(x3, s1, t1, s2, t2, w1t_bf, w2r_bf)


# ----------------------------------------------------------------------------
# Public forward (NCHW in / NCHW out).
# ----------------------------------------------------------------------------
def bottleneck_forward(x_nchw, g1, b1, w1, g2, b2, w2_hwio):
    n, cin, h, w = x_nchw.shape
    c2 = w1.shape[1]
    kk = w2_hwio.shape[-1]
    hw = h * w
    m = n * hw

    x3 = x_nchw.reshape(n, cin, hw)          # free metadata reshape (NCHW)

    # BN1 batch statistics: trivial reduction -> plain XLA (drops one launch).
    mean1 = jnp.mean(x_nchw, axis=(0, 2, 3))
    var1 = jnp.var(x_nchw, axis=(0, 2, 3))                    # biased (training)
    scale1 = g1.reshape(-1) * jax.lax.rsqrt(var1 + EPS)
    shift1 = b1.reshape(-1) - mean1 * scale1
    s1 = scale1.reshape(cin, 1).astype(jnp.float32)
    t1 = shift1.reshape(cin, 1).astype(jnp.float32)

    w1t_bf = w1.T.astype(jnp.bfloat16)                        # (C2, Cin)
    w2r_bf = (jnp.transpose(w2_hwio, (3, 0, 1, 2))
              .reshape(kk, 9 * c2).astype(jnp.bfloat16))      # (K, 9*C2)

    # BN2 batch statistics of the unpadded 1x1-conv activations.
    hsum, hsq = _h_stats(x3, s1, t1, w1t_bf)
    mean2 = hsum[:, 0] / m
    # TODO(synk): single-pass E[x^2]-E[x]^2 in f32; switch to a two-pass
    # variance if activations develop a large mean/std ratio.
    var2 = hsq[:, 0] / m - mean2 * mean2
    scale2 = g2.reshape(-1) * jax.lax.rsqrt(var2 + EPS)
    shift2 = b2.reshape(-1) - mean2 * scale2
    s2 = scale2.reshape(c2, 1).astype(jnp.float32)
    t2 = shift2.reshape(c2, 1).astype(jnp.float32)

    # Fused main pass writes the concatenated (N, Cin+K, H*W) output directly.
    out = _fused_pass(x3, s1, t1, s2, t2, w1t_bf, w2r_bf, h, w)
    return out.reshape(n, cin + kk, h, w)


# ----------------------------------------------------------------------------
# Pure-JAX reference (module semantics) for the correctness check.
# ----------------------------------------------------------------------------
def reference_forward(x, g1, b1, w1, g2, b2, w2_hwio):
    def bn_relu(v, g, b):
        mean = v.mean(axis=(0, 2, 3), keepdims=True)
        var = v.var(axis=(0, 2, 3), keepdims=True)            # biased, training
        gn = g.reshape(1, -1, 1, 1)
        bn = b.reshape(1, -1, 1, 1)
        return jnp.maximum((v - mean) / jnp.sqrt(var + EPS) * gn + bn, 0.0)

    a1 = bn_relu(x, g1, b1)
    w1_oihw = w1.T.reshape(w1.shape[1], w1.shape[0], 1, 1)
    hmat = jax.lax.conv_general_dilated(
        a1, w1_oihw, (1, 1), "VALID",
        dimension_numbers=("NCHW", "OIHW", "NCHW"))
    a2 = bn_relu(hmat, g2, b2)
    w2_oihw = jnp.transpose(w2_hwio, (3, 2, 0, 1))
    res = jax.lax.conv_general_dilated(
        a2, w2_oihw, (1, 1), ((1, 1), (1, 1)),
        dimension_numbers=("NCHW", "OIHW", "NCHW"))
    return jnp.concatenate([x, res], axis=1)


if __name__ == "__main__":
    # Shapes consistent with the module: Bottleneck(in_channels=4, k=8).
    N, Cin, H, W = 2, 4, 16, 16
    K_GROWTH = 8
    C2 = 4 * K_GROWTH  # 32

    key = jax.random.PRNGKey(0)
    k0, k1, k2, k3, k4, k5, k6 = jax.random.split(key, 7)

    x = jax.random.normal(k0, (N, Cin, H, W), jnp.float32)
    g1 = 1.0 + 0.1 * jax.random.normal(k1, (1, Cin), jnp.float32)
    b1 = 0.1 * jax.random.normal(k2, (1, Cin), jnp.float32)
    w1 = jax.random.normal(k3, (Cin, C2), jnp.float32) / np.sqrt(Cin)
    g2 = 1.0 + 0.1 * jax.random.normal(k4, (1, C2), jnp.float32)
    b2 = 0.1 * jax.random.normal(k5, (1, C2), jnp.float32)
    w2 = jax.random.normal(k6, (3, 3, C2, K_GROWTH), jnp.float32) / np.sqrt(9 * C2)

    fwd = jax.jit(bottleneck_forward)
    out = jax.block_until_ready(fwd(x, g1, b1, w1, g2, b2, w2))
    ref = jax.block_until_ready(reference_forward(x, g1, b1, w1, g2, b2, w2))

    assert out.shape == (N, Cin + K_GROWTH, H, W), out.shape
    # bf16 MXU operands (f32 accumulation) => bf16-level comparison tolerance.
    np.testing.assert_allclose(np.asarray(out), np.asarray(ref),
                               rtol=2e-2, atol=2e-2)
    print("KERNEL_OK")
</pallas_src>

<mosaic_0001>
module attributes {stable_mosaic.version = 11 : i64} {
  func.func @_h_stats_kernel(%arg0: i32, %arg1: memref<1x4x256xf32, #tpu.memory_space<vmem>>, %arg2: memref<4x1xf32, #tpu.memory_space<vmem>>, %arg3: memref<4x1xf32, #tpu.memory_space<vmem>>, %arg4: memref<32x4xbf16, #tpu.memory_space<vmem>>, %arg5: memref<32x1xf32, #tpu.memory_space<vmem>>, %arg6: memref<32x1xf32, #tpu.memory_space<vmem>>) attributes {dimension_semantics = [#tpu.dimension_semantics<arbitrary>], iteration_bounds = array<i64: 2>, scalar_prefetch = 0 : i64, scratch_operands = 0 : i64, tpu.core_type = #tpu.core_type<tc>, window_params = [{transform_indices = @transform_0, window_bounds = array<i64: 1, 4, 256>}, {pipeline_mode = #tpu.pipeline_mode<synchronous>, transform_indices = @transform_1, window_bounds = array<i64: 4, 1>}, {pipeline_mode = #tpu.pipeline_mode<synchronous>, transform_indices = @transform_2, window_bounds = array<i64: 4, 1>}, {pipeline_mode = #tpu.pipeline_mode<synchronous>, transform_indices = @transform_3, window_bounds = array<i64: 32, 4>}, {pipeline_mode = #tpu.pipeline_mode<synchronous>, transform_indices = @transform_4, window_bounds = array<i64: 32, 1>}, {pipeline_mode = #tpu.pipeline_mode<synchronous>, transform_indices = @transform_5, window_bounds = array<i64: 32, 1>}]} {
    %c0_i32 = arith.constant 0 : i32
    %0 = arith.cmpi eq, %arg0, %c0_i32 : i32
    %1 = arith.extui %0 : i1 to i32
    %c0_i32_0 = arith.constant 0 : i32
    %2 = arith.cmpi ne, %1, %c0_i32_0 : i32
    scf.if %2 {
      %cst_20 = arith.constant 0.000000e+00 : f32
      %27 = vector.broadcast %cst_20 : f32 to vector<32x1xf32>
      %c0_21 = arith.constant 0 : index
      %c0_22 = arith.constant 0 : index
      %28 = vector.load %arg5[%c0_21, %c0_22] : memref<32x1xf32, #tpu.memory_space<vmem>>, vector<32x1xf32>
      tpu.vector_store %arg5[%c0_21, %c0_22], %27 {strides = array<i32>} : memref<32x1xf32, #tpu.memory_space<vmem>>, vector<32x1xf32>,
      %cst_23 = arith.constant 0.000000e+00 : f32
      %29 = vector.broadcast %cst_23 : f32 to vector<32x1xf32>
      %c0_24 = arith.constant 0 : index
      %c0_25 = arith.constant 0 : index
      %30 = vector.load %arg6[%c0_24, %c0_25] : memref<32x1xf32, #tpu.memory_space<vmem>>, vector<32x1xf32>
      tpu.vector_store %arg6[%c0_24, %c0_25], %29 {strides = array<i32>} : memref<32x1xf32, #tpu.memory_space<vmem>>, vector<32x1xf32>,
    } else {
    }
    %c0 = arith.constant 0 : index
    %c0_1 = arith.constant 0 : index
    %c0_2 = arith.constant 0 : index
    %3 = vector.load %arg1[%c0, %c0_1, %c0_2] : memref<1x4x256xf32, #tpu.memory_space<vmem>>, vector<1x4x256xf32>
    %4 = vector.shape_cast %3 : vector<1x4x256xf32> to vector<4x256xf32>
    %c0_3 = arith.constant 0 : index
    %c0_4 = arith.constant 0 : index
    %5 = vector.load %arg2[%c0_3, %c0_4] : memref<4x1xf32, #tpu.memory_space<vmem>>, vector<4x1xf32>
    %6 = vector.broadcast %5 : vector<4x1xf32> to vector<4x256xf32>
    %7 = arith.mulf %4, %6 : vector<4x256xf32>
    %c0_5 = arith.constant 0 : index
    %c0_6 = arith.constant 0 : index
    %8 = vector.load %arg3[%c0_5, %c0_6] : memref<4x1xf32, #tpu.memory_space<vmem>>, vector<4x1xf32>
    %9 = vector.broadcast %8 : vector<4x1xf32> to vector<4x256xf32>
    %10 = arith.addf %7, %9 : vector<4x256xf32>
    %cst = arith.constant 0.000000e+00 : f32
    %11 = vector.broadcast %cst : f32 to vector<4x256xf32>
    %12 = arith.maximumf %10, %11 : vector<4x256xf32>
    %c0_7 = arith.constant 0 : index
    %c0_8 = arith.constant 0 : index
    %13 = vector.load %arg4[%c0_7, %c0_8] : memref<32x4xbf16, #tpu.memory_space<vmem>>, vector<32x4xbf16>
    %14 = arith.truncf %12 : vector<4x256xf32> to vector<4x256xbf16>
    %cst_9 = arith.constant dense<0.000000e+00> : vector<32x256xf32>
    %15 = tpu.matmul %13, %14, %cst_9 {dimension_numbers = #tpu.dot_dimension_numbers<[1], [0], [0], [1], [0, 0, 1, 1], [], []>} : vector<32x4xbf16>, vector<4x256xbf16>, vector<32x256xf32> -> vector<32x256xf32>
    %c0_10 = arith.constant 0 : index
    %c0_11 = arith.constant 0 : index
    %16 = vector.load %arg5[%c0_10, %c0_11] : memref<32x1xf32, #tpu.memory_space<vmem>>, vector<32x1xf32>
    %cst_12 = arith.constant dense<0.000000e+00> : vector<32xf32>
    %17 = vector.multi_reduction <add>, %15, %cst_12 [1] : vector<32x256xf32> to vector<32xf32>
    %18 = vector.shape_cast %17 : vector<32xf32> to vector<32x1xf32>
    %19 = arith.addf %16, %18 : vector<32x1xf32>
    %c0_13 = arith.constant 0 : index
    %c0_14 = arith.constant 0 : index
    %20 = vector.load %arg5[%c0_13, %c0_14] : memref<32x1xf32, #tpu.memory_space<vmem>>, vector<32x1xf32>
    tpu.vector_store %arg5[%c0_13, %c0_14], %19 {strides = array<i32>} : memref<32x1xf32, #tpu.memory_space<vmem>>, vector<32x1xf32>,
    %c0_15 = arith.constant 0 : index
    %c0_16 = arith.constant 0 : index
    %21 = vector.load %arg6[%c0_15, %c0_16] : memref<32x1xf32, #tpu.memory_space<vmem>>, vector<32x1xf32>
    %22 = arith.mulf %15, %15 : vector<32x256xf32>
    %cst_17 = arith.constant dense<0.000000e+00> : vector<32xf32>
    %23 = vector.multi_reduction <add>, %22, %cst_17 [1] : vector<32x256xf32> to vector<32xf32>
    %24 = vector.shape_cast %23 : vector<32xf32> to vector<32x1xf32>
    %25 = arith.addf %21, %24 : vector<32x1xf32>
    %c0_18 = arith.constant 0 : index
    %c0_19 = arith.constant 0 : index
    %26 = vector.load %arg6[%c0_18, %c0_19] : memref<32x1xf32, #tpu.memory_space<vmem>>, vector<32x1xf32>
    tpu.vector_store %arg6[%c0_18, %c0_19], %25 {strides = array<i32>} : memref<32x1xf32, #tpu.memory_space<vmem>>, vector<32x1xf32>,
    return
  }
  func.func @transform_0(%arg0: i32) -> (i32, i32, i32) {
    %c0_i32 = arith.constant 0 : i32
    %c0_i32_0 = arith.constant 0 : i32
    %c0_i32_1 = arith.constant 0 : i32
    return %arg0, %c0_i32, %c0_i32_0 : i32, i32, i32
  }
  func.func @transform_1(%arg0: i32) -> (i32, i32) {
    %c0_i32 = arith.constant 0 : i32
    %c0_i32_0 = arith.constant 0 : i32
    %c0_i32_1 = arith.constant 0 : i32
    return %c0_i32, %c0_i32_0 : i32, i32
  }
  func.func @transform_2(%arg0: i32) -> (i32, i32) {
    %c0_i32 = arith.constant 0 : i32
    %c0_i32_0 = arith.constant 0 : i32
    %c0_i32_1 = arith.constant 0 : i32
    return %c0_i32, %c0_i32_0 : i32, i32
  }
  func.func @transform_3(%arg0: i32) -> (i32, i32) {
    %c0_i32 = arith.constant 0 : i32
    %c0_i32_0 = arith.constant 0 : i32
    %c0_i32_1 = arith.constant 0 : i32
    return %c0_i32, %c0_i32_0 : i32, i32
  }
  func.func @transform_4(%arg0: i32) -> (i32, i32) {
    %c0_i32 = arith.constant 0 : i32
    %c0_i32_0 = arith.constant 0 : i32
    %c0_i32_1 = arith.constant 0 : i32
    return %c0_i32, %c0_i32_0 : i32, i32
  }
  func.func @transform_5(%arg0: i32) -> (i32, i32) {
    %c0_i32 = arith.constant 0 : i32
    %c0_i32_0 = arith.constant 0 : i32
    %c0_i32_1 = arith.constant 0 : i32
    return %c0_i32, %c0_i32_0 : i32, i32
  }
}

module attributes {stable_mosaic.version = 11 : i64} {
  func.func @kernel(%arg0: i32, %arg1: memref<1x4x256xf32, #tpu.memory_space<vmem>>, %arg2: memref<4x1xf32, #tpu.memory_space<vmem>>, %arg3: memref<4x1xf32, #tpu.memory_space<vmem>>, %arg4: memref<32x1xf32, #tpu.memory_space<vmem>>, %arg5: memref<32x1xf32, #tpu.memory_space<vmem>>, %arg6: memref<32x4xbf16, #tpu.memory_space<vmem>>, %arg7: memref<8x288xbf16, #tpu.memory_space<vmem>>, %arg8: memref<1x12x256xf32, #tpu.memory_space<vmem>>, %arg9: memref<32x384xbf16, #tpu.memory_space<vmem>>, %arg10: memref<288x288xbf16, #tpu.memory_space<vmem>>) attributes {dimension_semantics = [#tpu.dimension_semantics<parallel>], iteration_bounds = array<i64: 2>, scalar_prefetch = 0 : i64, scratch_operands = 2 : i64, tpu.core_type = #tpu.core_type<tc>, window_params = [{transform_indices = @transform_0, window_bounds = array<i64: 1, 4, 256>}, {pipeline_mode = #tpu.pipeline_mode<synchronous>, transform_indices = @transform_1, window_bounds = array<i64: 4, 1>}, {pipeline_mode = #tpu.pipeline_mode<synchronous>, transform_indices = @transform_2, window_bounds = array<i64: 4, 1>}, {pipeline_mode = #tpu.pipeline_mode<synchronous>, transform_indices = @transform_3, window_bounds = array<i64: 32, 1>}, {pipeline_mode = #tpu.pipeline_mode<synchronous>, transform_indices = @transform_4, window_bounds = array<i64: 32, 1>}, {pipeline_mode = #tpu.pipeline_mode<synchronous>, transform_indices = @transform_5, window_bounds = array<i64: 32, 4>}, {pipeline_mode = #tpu.pipeline_mode<synchronous>, transform_indices = @transform_6, window_bounds = array<i64: 8, 288>}, {transform_indices = @transform_7, window_bounds = array<i64: 1, 12, 256>}]} {
    %c0 = arith.constant 0 : index
    %c0_0 = arith.constant 0 : index
    %c0_1 = arith.constant 0 : index
    %0 = vector.load %arg1[%c0, %c0_0, %c0_1] : memref<1x4x256xf32, #tpu.memory_space<vmem>>, vector<1x4x256xf32>
    %1 = vector.shape_cast %0 : vector<1x4x256xf32> to vector<4x256xf32>
    %c0_2 = arith.constant 0 : index
    %c0_3 = arith.constant 0 : index
    %2 = vector.load %arg2[%c0_2, %c0_3] : memref<4x1xf32, #tpu.memory_space<vmem>>, vector<4x1xf32>
    %3 = vector.broadcast %2 : vector<4x1xf32> to vector<4x256xf32>
    %4 = arith.mulf %1, %3 : vector<4x256xf32>
    %c0_4 = arith.constant 0 : index
    %c0_5 = arith.constant 0 : index
    %5 = vector.load %arg3[%c0_4, %c0_5] : memref<4x1xf32, #tpu.memory_space<vmem>>, vector<4x1xf32>
    %6 = vector.broadcast %5 : vector<4x1xf32> to vector<4x256xf32>
    %7 = arith.addf %4, %6 : vector<4x256xf32>
    %cst = arith.constant 0.000000e+00 : f32
    %8 = vector.broadcast %cst : f32 to vector<4x256xf32>
    %9 = arith.maximumf %7, %8 : vector<4x256xf32>
    %c0_6 = arith.constant 0 : index
    %c0_7 = arith.constant 0 : index
    %10 = vector.load %arg6[%c0_6, %c0_7] : memref<32x4xbf16, #tpu.memory_space<vmem>>, vector<32x4xbf16>
    %11 = arith.truncf %9 : vector<4x256xf32> to vector<4x256xbf16>
    %cst_8 = arith.constant dense<0.000000e+00> : vector<32x256xf32>
    %12 = tpu.matmul %10, %11, %cst_8 {dimension_numbers = #tpu.dot_dimension_numbers<[1], [0], [0], [1], [0, 0, 1, 1], [], []>} : vector<32x4xbf16>, vector<4x256xbf16>, vector<32x256xf32> -> vector<32x256xf32>
    %c0_9 = arith.constant 0 : index
    %c0_10 = arith.constant 0 : index
    %13 = vector.load %arg4[%c0_9, %c0_10] : memref<32x1xf32, #tpu.memory_space<vmem>>, vector<32x1xf32>
    %14 = vector.broadcast %13 : vector<32x1xf32> to vector<32x256xf32>
    %15 = arith.mulf %12, %14 : vector<32x256xf32>
    %c0_11 = arith.constant 0 : index
    %c0_12 = arith.constant 0 : index
    %16 = vector.load %arg5[%c0_11, %c0_12] : memref<32x1xf32, #tpu.memory_space<vmem>>, vector<32x1xf32>
    %17 = vector.broadcast %16 : vector<32x1xf32> to vector<32x256xf32>
    %18 = arith.addf %15, %17 : vector<32x256xf32>
    %cst_13 = arith.constant 0.000000e+00 : f32
    %19 = vector.broadcast %cst_13 : f32 to vector<32x256xf32>
    %20 = arith.maximumf %18, %19 : vector<32x256xf32>
    %21 = arith.truncf %20 : vector<32x256xf32> to vector<32x256xbf16>
    %cst_14 = arith.constant 0.000000e+00 : bf16
    %22 = vector.broadcast %cst_14 : bf16 to vector<32x384xbf16>
    %c0_15 = arith.constant 0 : index
    %c0_16 = arith.constant 0 : index
    %23 = vector.load %arg9[%c0_15, %c0_16] : memref<32x384xbf16, #tpu.memory_space<vmem>>, vector<32x384xbf16>
    tpu.vector_store %arg9[%c0_15, %c0_16], %22 {strides = array<i32>} : memref<32x384xbf16, #tpu.memory_space<vmem>>, vector<32x384xbf16>,
    %24 = vector.extract_strided_slice %21 {offsets = [0, 0], sizes = [32, 16], strides = [1, 1]} : vector<32x256xbf16> to vector<32x16xbf16>
    %c0_17 = arith.constant 0 : index
    %c19 = arith.constant 19 : index
    %25 = vector.load %arg9[%c0_17, %c19] : memref<32x384xbf16, #tpu.memory_space<vmem>>, vector<32x16xbf16>
    tpu.vector_store %arg9[%c0_17, %c19], %24 {strides = array<i32>} : memref<32x384xbf16, #tpu.memory_space<vmem>>, vector<32x16xbf16>,
    %26 = vector.extract_strided_slice %21 {offsets = [0, 16], sizes = [32, 16], strides = [1, 1]} : vector<32x256xbf16> to vector<32x16xbf16>
    %c0_18 = arith.constant 0 : index
    %c37 = arith.constant 37 : index
    %27 = vector.load %arg9[%c0_18, %c37] : memref<32x384xbf16, #tpu.memory_space<vmem>>, vector<32x16xbf16>
    tpu.vector_store %arg9[%c0_18, %c37], %26 {strides = array<i32>} : memref<32x384xbf16, #tpu.memory_space<vmem>>, vector<32x16xbf16>,
    %28 = vector.extract_strided_slice %21 {offsets = [0, 32], sizes = [32, 16], strides = [1, 1]} : vector<32x256xbf16> to vector<32x16xbf16>
    %c0_19 = arith.constant 0 : index
    %c55 = arith.constant 55 : index
    %29 = vector.load %arg9[%c0_19, %c55] : memref<32x384xbf16, #tpu.memory_space<vmem>>, vector<32x16xbf16>
    tpu.vector_store %arg9[%c0_19, %c55], %28 {strides = array<i32>} : memref<32x384xbf16, #tpu.memory_space<vmem>>, vector<32x16xbf16>,
    %30 = vector.extract_strided_slice %21 {offsets = [0, 48], sizes = [32, 16], strides = [1, 1]} : vector<32x256xbf16> to vector<32x16xbf16>
    %c0_20 = arith.constant 0 : index
    %c73 = arith.constant 73 : index
    %31 = vector.load %arg9[%c0_20, %c73] : memref<32x384xbf16, #tpu.memory_space<vmem>>, vector<32x16xbf16>
    tpu.vector_store %arg9[%c0_20, %c73], %30 {strides = array<i32>} : memref<32x384xbf16, #tpu.memory_space<vmem>>, vector<32x16xbf16>,
    %32 = vector.extract_strided_slice %21 {offsets = [0, 64], sizes = [32, 16], strides = [1, 1]} : vector<32x256xbf16> to vector<32x16xbf16>
    %c0_21 = arith.constant 0 : index
    %c91 = arith.constant 91 : index
    %33 = vector.load %arg9[%c0_21, %c91] : memref<32x384xbf16, #tpu.memory_space<vmem>>, vector<32x16xbf16>
    tpu.vector_store %arg9[%c0_21, %c91], %32 {strides = array<i32>} : memref<32x384xbf16, #tpu.memory_space<vmem>>, vector<32x16xbf16>,
    %34 = vector.extract_strided_slice %21 {offsets = [0, 80], sizes = [32, 16], strides = [1, 1]} : vector<32x256xbf16> to vector<32x16xbf16>
    %c0_22 = arith.constant 0 : index
    %c109 = arith.constant 109 : index
    %35 = vector.load %arg9[%c0_22, %c109] : memref<32x384xbf16, #tpu.memory_space<vmem>>, vector<32x16xbf16>
    tpu.vector_store %arg9[%c0_22, %c109], %34 {strides = array<i32>} : memref<32x384xbf16, #tpu.memory_space<vmem>>, vector<32x16xbf16>,
    %36 = vector.extract_strided_slice %21 {offsets = [0, 96], sizes = [32, 16], strides = [1, 1]} : vector<32x256xbf16> to vector<32x16xbf16>
    %c0_23 = arith.constant 0 : index
    %c127 = arith.constant 127 : index
    %37 = vector.load %arg9[%c0_23, %c127] : memref<32x384xbf16, #tpu.memory_space<vmem>>, vector<32x16xbf16>
    tpu.vector_store %arg9[%c0_23, %c127], %36 {strides = array<i32>} : memref<32x384xbf16, #tpu.memory_space<vmem>>, vector<32x16xbf16>,
    %38 = vector.extract_strided_slice %21 {offsets = [0, 112], sizes = [32, 16], strides = [1, 1]} : vector<32x256xbf16> to vector<32x16xbf16>
    %c0_24 = arith.constant 0 : index
    %c145 = arith.constant 145 : index
    %39 = vector.load %arg9[%c0_24, %c145] : memref<32x384xbf16, #tpu.memory_space<vmem>>, vector<32x16xbf16>
    tpu.vector_store %arg9[%c0_24, %c145], %38 {strides = array<i32>} : memref<32x384xbf16, #tpu.memory_space<vmem>>, vector<32x16xbf16>,
    %40 = vector.extract_strided_slice %21 {offsets = [0, 128], sizes = [32, 16], strides = [1, 1]} : vector<32x256xbf16> to vector<32x16xbf16>
    %c0_25 = arith.constant 0 : index
    %c163 = arith.constant 163 : index
    %41 = vector.load %arg9[%c0_25, %c163] : memref<32x384xbf16, #tpu.memory_space<vmem>>, vector<32x16xbf16>
    tpu.vector_store %arg9[%c0_25, %c163], %40 {strides = array<i32>} : memref<32x384xbf16, #tpu.memory_space<vmem>>, vector<32x16xbf16>,
    %42 = vector.extract_strided_slice %21 {offsets = [0, 144], sizes = [32, 16], strides = [1, 1]} : vector<32x256xbf16> to vector<32x16xbf16>
    %c0_26 = arith.constant 0 : index
    %c181 = arith.constant 181 : index
    %43 = vector.load %arg9[%c0_26, %c181] : memref<32x384xbf16, #tpu.memory_space<vmem>>, vector<32x16xbf16>
    tpu.vector_store %arg9[%c0_26, %c181], %42 {strides = array<i32>} : memref<32x384xbf16, #tpu.memory_space<vmem>>, vector<32x16xbf16>,
    %44 = vector.extract_strided_slice %21 {offsets = [0, 160], sizes = [32, 16], strides = [1, 1]} : vector<32x256xbf16> to vector<32x16xbf16>
    %c0_27 = arith.constant 0 : index
    %c199 = arith.constant 199 : index
    %45 = vector.load %arg9[%c0_27, %c199] : memref<32x384xbf16, #tpu.memory_space<vmem>>, vector<32x16xbf16>
    tpu.vector_store %arg9[%c0_27, %c199], %44 {strides = array<i32>} : memref<32x384xbf16, #tpu.memory_space<vmem>>, vector<32x16xbf16>,
    %46 = vector.extract_strided_slice %21 {offsets = [0, 176], sizes = [32, 16], strides = [1, 1]} : vector<32x256xbf16> to vector<32x16xbf16>
    %c0_28 = arith.constant 0 : index
    %c217 = arith.constant 217 : index
    %47 = vector.load %arg9[%c0_28, %c217] : memref<32x384xbf16, #tpu.memory_space<vmem>>, vector<32x16xbf16>
    tpu.vector_store %arg9[%c0_28, %c217], %46 {strides = array<i32>} : memref<32x384xbf16, #tpu.memory_space<vmem>>, vector<32x16xbf16>,
    %48 = vector.extract_strided_slice %21 {offsets = [0, 192], sizes = [32, 16], strides = [1, 1]} : vector<32x256xbf16> to vector<32x16xbf16>
    %c0_29 = arith.constant 0 : index
    %c235 = arith.constant 235 : index
    %49 = vector.load %arg9[%c0_29, %c235] : memref<32x384xbf16, #tpu.memory_space<vmem>>, vector<32x16xbf16>
    tpu.vector_store %arg9[%c0_29, %c235], %48 {strides = array<i32>} : memref<32x384xbf16, #tpu.memory_space<vmem>>, vector<32x16xbf16>,
    %50 = vector.extract_strided_slice %21 {offsets = [0, 208], sizes = [32, 16], strides = [1, 1]} : vector<32x256xbf16> to vector<32x16xbf16>
    %c0_30 = arith.constant 0 : index
    %c253 = arith.constant 253 : index
    %51 = vector.load %arg9[%c0_30, %c253] : memref<32x384xbf16, #tpu.memory_space<vmem>>, vector<32x16xbf16>
    tpu.vector_store %arg9[%c0_30, %c253], %50 {strides = array<i32>} : memref<32x384xbf16, #tpu.memory_space<vmem>>, vector<32x16xbf16>,
    %52 = vector.extract_strided_slice %21 {offsets = [0, 224], sizes = [32, 16], strides = [1, 1]} : vector<32x256xbf16> to vector<32x16xbf16>
    %c0_31 = arith.constant 0 : index
    %c271 = arith.constant 271 : index
    %53 = vector.load %arg9[%c0_31, %c271] : memref<32x384xbf16, #tpu.memory_space<vmem>>, vector<32x16xbf16>
    tpu.vector_store %arg9[%c0_31, %c271], %52 {strides = array<i32>} : memref<32x384xbf16, #tpu.memory_space<vmem>>, vector<32x16xbf16>,
    %54 = vector.extract_strided_slice %21 {offsets = [0, 240], sizes = [32, 16], strides = [1, 1]} : vector<32x256xbf16> to vector<32x16xbf16>
    %c0_32 = arith.constant 0 : index
    %c289 = arith.constant 289 : index
    %55 = vector.load %arg9[%c0_32, %c289] : memref<32x384xbf16, #tpu.memory_space<vmem>>, vector<32x16xbf16>
    tpu.vector_store %arg9[%c0_32, %c289], %54 {strides = array<i32>} : memref<32x384xbf16, #tpu.memory_space<vmem>>, vector<32x16xbf16>,
    %c0_33 = arith.constant 0 : index
    %c0_34 = arith.constant 0 : index
    %56 = vector.load %arg9[%c0_33, %c0_34] : memref<32x384xbf16, #tpu.memory_space<vmem>>, vector<32x288xbf16>
    %c0_35 = arith.constant 0 : index
    %c0_36 = arith.constant 0 : index
    %57 = vector.load %arg10[%c0_35, %c0_36] : memref<288x288xbf16, #tpu.memory_space<vmem>>, vector<32x288xbf16>
    tpu.vector_store %arg10[%c0_35, %c0_36], %56 {strides = array<i32>} : memref<288x288xbf16, #tpu.memory_space<vmem>>, vector<32x288xbf16>,
    %c0_37 = arith.constant 0 : index
    %c1 = arith.constant 1 : index
    %58 = vector.load %arg9[%c0_37, %c1] : memref<32x384xbf16, #tpu.memory_space<vmem>>, vector<32x288xbf16>
    %c32 = arith.constant 32 : index
    %c0_38 = arith.constant 0 : index
    %59 = vector.load %arg10[%c32, %c0_38] : memref<288x288xbf16, #tpu.memory_space<vmem>>, vector<32x288xbf16>
    tpu.vector_store %arg10[%c32, %c0_38], %58 {strides = array<i32>} : memref<288x288xbf16, #tpu.memory_space<vmem>>, vector<32x288xbf16>,
    %c0_39 = arith.constant 0 : index
    %c2 = arith.constant 2 : index
    %60 = vector.load %arg9[%c0_39, %c2] : memref<32x384xbf16, #tpu.memory_space<vmem>>, vector<32x288xbf16>
    %c64 = arith.constant 64 : index
    %c0_40 = arith.constant 0 : index
    %61 = vector.load %arg10[%c64, %c0_40] : memref<288x288xbf16, #tpu.memory_space<vmem>>, vector<32x288xbf16>
    tpu.vector_store %arg10[%c64, %c0_40], %60 {strides = array<i32>} : memref<288x288xbf16, #tpu.memory_space<vmem>>, vector<32x288xbf16>,
    %c0_41 = arith.constant 0 : index
    %c18 = arith.constant 18 : index
    %62 = vector.load %arg9[%c0_41, %c18] : memref<32x384xbf16, #tpu.memory_space<vmem>>, vector<32x288xbf16>
    %c96 = arith.constant 96 : index
    %c0_42 = arith.constant 0 : index
    %63 = vector.load %arg10[%c96, %c0_42] : memref<288x288xbf16, #tpu.memory_space<vmem>>, vector<32x288xbf16>
    tpu.vector_store %arg10[%c96, %c0_42], %62 {strides = array<i32>} : memref<288x288xbf16, #tpu.memory_space<vmem>>, vector<32x288xbf16>,
    %c0_43 = arith.constant 0 : index
    %c19_44 = arith.constant 19 : index
    %64 = vector.load %arg9[%c0_43, %c19_44] : memref<32x384xbf16, #tpu.memory_space<vmem>>, vector<32x288xbf16>
    %c128 = arith.constant 128 : index
    %c0_45 = arith.constant 0 : index
    %65 = vector.load %arg10[%c128, %c0_45] : memref<288x288xbf16, #tpu.memory_space<vmem>>, vector<32x288xbf16>
    tpu.vector_store %arg10[%c128, %c0_45], %64 {strides = array<i32>} : memref<288x288xbf16, #tpu.memory_space<vmem>>, vector<32x288xbf16>,
    %c0_46 = arith.constant 0 : index
    %c20 = arith.constant 20 : index
    %66 = vector.load %arg9[%c0_46, %c20] : memref<32x384xbf16, #tpu.memory_space<vmem>>, vector<32x288xbf16>
    %c160 = arith.constant 160 : index
    %c0_47 = arith.constant 0 : index
    %67 = vector.load %arg10[%c160, %c0_47] : memref<288x288xbf16, #tpu.memory_space<vmem>>, vector<32x288xbf16>
    tpu.vector_store %arg10[%c160, %c0_47], %66 {strides = array<i32>} : memref<288x288xbf16, #tpu.memory_space<vmem>>, vector<32x288xbf16>,
    %c0_48 = arith.constant 0 : index
    %c36 = arith.constant 36 : index
    %68 = vector.load %arg9[%c0_48, %c36] : memref<32x384xbf16, #tpu.memory_space<vmem>>, vector<32x288xbf16>
    %c192 = arith.constant 192 : index
    %c0_49 = arith.constant 0 : index
    %69 = vector.load %arg10[%c192, %c0_49] : memref<288x288xbf16, #tpu.memory_space<vmem>>, vector<32x288xbf16>
    tpu.vector_store %arg10[%c192, %c0_49], %68 {strides = array<i32>} : memref<288x288xbf16, #tpu.memory_space<vmem>>, vector<32x288xbf16>,
    %c0_50 = arith.constant 0 : index
    %c37_51 = arith.constant 37 : index
    %70 = vector.load %arg9[%c0_50, %c37_51] : memref<32x384xbf16, #tpu.memory_space<vmem>>, vector<32x288xbf16>
    %c224 = arith.constant 224 : index
    %c0_52 = arith.constant 0 : index
    %71 = vector.load %arg10[%c224, %c0_52] : memref<288x288xbf16, #tpu.memory_space<vmem>>, vector<32x288xbf16>
    tpu.vector_store %arg10[%c224, %c0_52], %70 {strides = array<i32>} : memref<288x288xbf16, #tpu.memory_space<vmem>>, vector<32x288xbf16>,
    %c0_53 = arith.constant 0 : index
    %c38 = arith.constant 38 : index
    %72 = vector.load %arg9[%c0_53, %c38] : memref<32x384xbf16, #tpu.memory_space<vmem>>, vector<32x288xbf16>
    %c256 = arith.constant 256 : index
    %c0_54 = arith.constant 0 : index
    %73 = vector.load %arg10[%c256, %c0_54] : memref<288x288xbf16, #tpu.memory_space<vmem>>, vector<32x288xbf16>
    tpu.vector_store %arg10[%c256, %c0_54], %72 {strides = array<i32>} : memref<288x288xbf16, #tpu.memory_space<vmem>>, vector<32x288xbf16>,
    %c0_55 = arith.constant 0 : index
    %c0_56 = arith.constant 0 : index
    %74 = vector.load %arg7[%c0_55, %c0_56] : memref<8x288xbf16, #tpu.memory_space<vmem>>, vector<8x288xbf16>
    %c0_57 = arith.constant 0 : index
    %c0_58 = arith.constant 0 : index
    %75 = vector.load %arg10[%c0_57, %c0_58] : memref<288x288xbf16, #tpu.memory_space<vmem>>, vector<288x288xbf16>
    %cst_59 = arith.constant dense<0.000000e+00> : vector<8x288xf32>
    %76 = tpu.matmul %74, %75, %cst_59 {dimension_numbers = #tpu.dot_dimension_numbers<[1], [0], [0], [1], [0, 0, 1, 1], [], []>} : vector<8x288xbf16>, vector<288x288xbf16>, vector<8x288xf32> -> vector<8x288xf32>
    %c0_60 = arith.constant 0 : index
    %c0_61 = arith.constant 0 : index
    %c0_62 = arith.constant 0 : index
    %77 = vector.load %arg8[%c0_60, %c0_61, %c0_62] : memref<1x12x256xf32, #tpu.memory_space<vmem>>, vector<1x4x256xf32>
    %78 = vector.shape_cast %77 : vector<1x4x256xf32> to vector<4x256xf32>
    %79 = vector.shape_cast %1 : vector<4x256xf32> to vector<1x4x256xf32>
    tpu.vector_store %arg8[%c0_60, %c0_61, %c0_62], %79 {strides = array<i32>} : memref<1x12x256xf32, #tpu.memory_space<vmem>>, vector<1x4x256xf32>,
    %80 = vector.extract_strided_slice %76 {offsets = [0, 0], sizes = [8, 16], strides = [1, 1]} : vector<8x288xf32> to vector<8x16xf32>
    %c0_63 = arith.constant 0 : index
    %c4 = arith.constant 4 : index
    %c0_64 = arith.constant 0 : index
    %81 = vector.load %arg8[%c0_63, %c4, %c0_64] : memref<1x12x256xf32, #tpu.memory_space<vmem>>, vector<1x8x16xf32>
    %82 = vector.shape_cast %81 : vector<1x8x16xf32> to vector<8x16xf32>
    %83 = vector.shape_cast %80 : vector<8x16xf32> to vector<1x8x16xf32>
    tpu.vector_store %arg8[%c0_63, %c4, %c0_64], %83 {strides = array<i32>} : memref<1x12x256xf32, #tpu.memory_space<vmem>>, vector<1x8x16xf32>,
    %84 = vector.extract_strided_slice %76 {offsets = [0, 18], sizes = [8, 16], strides = [1, 1]} : vector<8x288xf32> to vector<8x16xf32>
    %c0_65 = arith.constant 0 : index
    %c4_66 = arith.constant 4 : index
    %c16 = arith.constant 16 : index
    %85 = vector.load %arg8[%c0_65, %c4_66, %c16] : memref<1x12x256xf32, #tpu.memory_space<vmem>>, vector<1x8x16xf32>
    %86 = vector.shape_cast %85 : vector<1x8x16xf32> to vector<8x16xf32>
    %87 = vector.shape_cast %84 : vector<8x16xf32> to vector<1x8x16xf32>
    tpu.vector_store %arg8[%c0_65, %c4_66, %c16], %87 {strides = array<i32>} : memref<1x12x256xf32, #tpu.memory_space<vmem>>, vector<1x8x16xf32>,
    %88 = vector.extract_strided_slice %76 {offsets = [0, 36], sizes = [8, 16], strides = [1, 1]} : vector<8x288xf32> to vector<8x16xf32>
    %c0_67 = arith.constant 0 : index
    %c4_68 = arith.constant 4 : index
    %c32_69 = arith.constant 32 : index
    %89 = vector.load %arg8[%c0_67, %c4_68, %c32_69] : memref<1x12x256xf32, #tpu.memory_space<vmem>>, vector<1x8x16xf32>
    %90 = vector.shape_cast %89 : vector<1x8x16xf32> to vector<8x16xf32>
    %91 = vector.shape_cast %88 : vector<8x16xf32> to vector<1x8x16xf32>
    tpu.vector_store %arg8[%c0_67, %c4_68, %c32_69], %91 {strides = array<i32>} : memref<1x12x256xf32, #tpu.memory_space<vmem>>, vector<1x8x16xf32>,
    %92 = vector.extract_strided_slice %76 {offsets = [0, 54], sizes = [8, 16], strides = [1, 1]} : vector<8x288xf32> to vector<8x16xf32>
    %c0_70 = arith.constant 0 : index
    %c4_71 = arith.constant 4 : index
    %c48 = arith.constant 48 : index
    %93 = vector.load %arg8[%c0_70, %c4_71, %c48] : memref<1x12x256xf32, #tpu.memory_space<vmem>>, vector<1x8x16xf32>
    %94 = vector.shape_cast %93 : vector<1x8x16xf32> to vector<8x16xf32>
    %95 = vector.shape_cast %92 : vector<8x16xf32> to vector<1x8x16xf32>
    tpu.vector_store %arg8[%c0_70, %c4_71, %c48], %95 {strides = array<i32>} : memref<1x12x256xf32, #tpu.memory_space<vmem>>, vector<1x8x16xf32>,
    %96 = vector.extract_strided_slice %76 {offsets = [0, 72], sizes = [8, 16], strides = [1, 1]} : vector<8x288xf32> to vector<8x16xf32>
    %c0_72 = arith.constant 0 : index
    %c4_73 = arith.constant 4 : index
    %c64_74 = arith.constant 64 : index
    %97 = vector.load %arg8[%c0_72, %c4_73, %c64_74] : memref<1x12x256xf32, #tpu.memory_space<vmem>>, vector<1x8x16xf32>
    %98 = vector.shape_cast %97 : vector<1x8x16xf32> to vector<8x16xf32>
    %99 = vector.shape_cast %96 : vector<8x16xf32> to vector<1x8x16xf32>
    tpu.vector_store %arg8[%c0_72, %c4_73, %c64_74], %99 {strides = array<i32>} : memref<1x12x256xf32, #tpu.memory_space<vmem>>, vector<1x8x16xf32>,
    %100 = vector.extract_strided_slice %76 {offsets = [0, 90], sizes = [8, 16], strides = [1, 1]} : vector<8x288xf32> to vector<8x16xf32>
    %c0_75 = arith.constant 0 : index
    %c4_76 = arith.constant 4 : index
    %c80 = arith.constant 80 : index
    %101 = vector.load %arg8[%c0_75, %c4_76, %c80] : memref<1x12x256xf32, #tpu.memory_space<vmem>>, vector<1x8x16xf32>
    %102 = vector.shape_cast %101 : vector<1x8x16xf32> to vector<8x16xf32>
    %103 = vector.shape_cast %100 : vector<8x16xf32> to vector<1x8x16xf32>
    tpu.vector_store %arg8[%c0_75, %c4_76, %c80], %103 {strides = array<i32>} : memref<1x12x256xf32, #tpu.memory_space<vmem>>, vector<1x8x16xf32>,
    %104 = vector.extract_strided_slice %76 {offsets = [0, 108], sizes = [8, 16], strides = [1, 1]} : vector<8x288xf32> to vector<8x16xf32>
    %c0_77 = arith.constant 0 : index
    %c4_78 = arith.constant 4 : index
    %c96_79 = arith.constant 96 : index
    %105 = vector.load %arg8[%c0_77, %c4_78, %c96_79] : memref<1x12x256xf32, #tpu.memory_space<vmem>>, vector<1x8x16xf32>
    %106 = vector.shape_cast %105 : vector<1x8x16xf32> to vector<8x16xf32>
    %107 = vector.shape_cast %104 : vector<8x16xf32> to vector<1x8x16xf32>
    tpu.vector_store %arg8[%c0_77, %c4_78, %c96_79], %107 {strides = array<i32>} : memref<1x12x256xf32, #tpu.memory_space<vmem>>, vector<1x8x16xf32>,
    %108 = vector.extract_strided_slice %76 {offsets = [0, 126], sizes = [8, 16], strides = [1, 1]} : vector<8x288xf32> to vector<8x16xf32>
    %c0_80 = arith.constant 0 : index
    %c4_81 = arith.constant 4 : index
    %c112 = arith.constant 112 : index
    %109 = vector.load %arg8[%c0_80, %c4_81, %c112] : memref<1x12x256xf32, #tpu.memory_space<vmem>>, vector<1x8x16xf32>
    %110 = vector.shape_cast %109 : vector<1x8x16xf32> to vector<8x16xf32>
    %111 = vector.shape_cast %108 : vector<8x16xf32> to vector<1x8x16xf32>
    tpu.vector_store %arg8[%c0_80, %c4_81, %c112], %111 {strides = array<i32>} : memref<1x12x256xf32, #tpu.memory_space<vmem>>, vector<1x8x16xf32>,
    %112 = vector.extract_strided_slice %76 {offsets = [0, 144], sizes = [8, 16], strides = [1, 1]} : vector<8x288xf32> to vector<8x16xf32>
    %c0_82 = arith.constant 0 : index
    %c4_83 = arith.constant 4 : index
    %c128_84 = arith.constant 128 : index
    %113 = vector.load %arg8[%c0_82, %c4_83, %c128_84] : memref<1x12x256xf32, #tpu.memory_space<vmem>>, vector<1x8x16xf32>
    %114 = vector.shape_cast %113 : vector<1x8x16xf32> to vector<8x16xf32>
    %115 = vector.shape_cast %112 : vector<8x16xf32> to vector<1x8x16xf32>
    tpu.vector_store %arg8[%c0_82, %c4_83, %c128_84], %115 {strides = array<i32>} : memref<1x12x256xf32, #tpu.memory_space<vmem>>, vector<1x8x16xf32>,
    %116 = vector.extract_strided_slice %76 {offsets = [0, 162], sizes = [8, 16], strides = [1, 1]} : vector<8x288xf32> to vector<8x16xf32>
    %c0_85 = arith.constant 0 : index
    %c4_86 = arith.constant 4 : index
    %c144 = arith.constant 144 : index
    %117 = vector.load %arg8[%c0_85, %c4_86, %c144] : memref<1x12x256xf32, #tpu.memory_space<vmem>>, vector<1x8x16xf32>
    %118 = vector.shape_cast %117 : vector<1x8x16xf32> to vector<8x16xf32>
    %119 = vector.shape_cast %116 : vector<8x16xf32> to vector<1x8x16xf32>
    tpu.vector_store %arg8[%c0_85, %c4_86, %c144], %119 {strides = array<i32>} : memref<1x12x256xf32, #tpu.memory_space<vmem>>, vector<1x8x16xf32>,
    %120 = vector.extract_strided_slice %76 {offsets = [0, 180], sizes = [8, 16], strides = [1, 1]} : vector<8x288xf32> to vector<8x16xf32>
    %c0_87 = arith.constant 0 : index
    %c4_88 = arith.constant 4 : index
    %c160_89 = arith.constant 160 : index
    %121 = vector.load %arg8[%c0_87, %c4_88, %c160_89] : memref<1x12x256xf32, #tpu.memory_space<vmem>>, vector<1x8x16xf32>
    %122 = vector.shape_cast %121 : vector<1x8x16xf32> to vector<8x16xf32>
    %123 = vector.shape_cast %120 : vector<8x16xf32> to vector<1x8x16xf32>
    tpu.vector_store %arg8[%c0_87, %c4_88, %c160_89], %123 {strides = array<i32>} : memref<1x12x256xf32, #tpu.memory_space<vmem>>, vector<1x8x16xf32>,
    %124 = vector.extract_strided_slice %76 {offsets = [0, 198], sizes = [8, 16], strides = [1, 1]} : vector<8x288xf32> to vector<8x16xf32>
    %c0_90 = arith.constant 0 : index
    %c4_91 = arith.constant 4 : index
    %c176 = arith.constant 176 : index
    %125 = vector.load %arg8[%c0_90, %c4_91, %c176] : memref<1x12x256xf32, #tpu.memory_space<vmem>>, vector<1x8x16xf32>
    %126 = vector.shape_cast %125 : vector<1x8x16xf32> to vector<8x16xf32>
    %127 = vector.shape_cast %124 : vector<8x16xf32> to vector<1x8x16xf32>
    tpu.vector_store %arg8[%c0_90, %c4_91, %c176], %127 {strides = array<i32>} : memref<1x12x256xf32, #tpu.memory_space<vmem>>, vector<1x8x16xf32>,
    %128 = vector.extract_strided_slice %76 {offsets = [0, 216], sizes = [8, 16], strides = [1, 1]} : vector<8x288xf32> to vector<8x16xf32>
    %c0_92 = arith.constant 0 : index
    %c4_93 = arith.constant 4 : index
    %c192_94 = arith.constant 192 : index
    %129 = vector.load %arg8[%c0_92, %c4_93, %c192_94] : memref<1x12x256xf32, #tpu.memory_space<vmem>>, vector<1x8x16xf32>
    %130 = vector.shape_cast %129 : vector<1x8x16xf32> to vector<8x16xf32>
    %131 = vector.shape_cast %128 : vector<8x16xf32> to vector<1x8x16xf32>
    tpu.vector_store %arg8[%c0_92, %c4_93, %c192_94], %131 {strides = array<i32>} : memref<1x12x256xf32, #tpu.memory_space<vmem>>, vector<1x8x16xf32>,
    %132 = vector.extract_strided_slice %76 {offsets = [0, 234], sizes = [8, 16], strides = [1, 1]} : vector<8x288xf32> to vector<8x16xf32>
    %c0_95 = arith.constant 0 : index
    %c4_96 = arith.constant 4 : index
    %c208 = arith.constant 208 : index
    %133 = vector.load %arg8[%c0_95, %c4_96, %c208] : memref<1x12x256xf32, #tpu.memory_space<vmem>>, vector<1x8x16xf32>
    %134 = vector.shape_cast %133 : vector<1x8x16xf32> to vector<8x16xf32>
    %135 = vector.shape_cast %132 : vector<8x16xf32> to vector<1x8x16xf32>
    tpu.vector_store %arg8[%c0_95, %c4_96, %c208], %135 {strides = array<i32>} : memref<1x12x256xf32, #tpu.memory_space<vmem>>, vector<1x8x16xf32>,
    %136 = vector.extract_strided_slice %76 {offsets = [0, 252], sizes = [8, 16], strides = [1, 1]} : vector<8x288xf32> to vector<8x16xf32>
    %c0_97 = arith.constant 0 : index
    %c4_98 = arith.constant 4 : index
    %c224_99 = arith.constant 224 : index
    %137 = vector.load %arg8[%c0_97, %c4_98, %c224_99] : memref<1x12x256xf32, #tpu.memory_space<vmem>>, vector<1x8x16xf32>
    %138 = vector.shape_cast %137 : vector<1x8x16xf32> to vector<8x16xf32>
    %139 = vector.shape_cast %136 : vector<8x16xf32> to vector<1x8x16xf32>
    tpu.vector_store %arg8[%c0_97, %c4_98, %c224_99], %139 {strides = array<i32>} : memref<1x12x256xf32, #tpu.memory_space<vmem>>, vector<1x8x16xf32>,
    %140 = vector.extract_strided_slice %76 {offsets = [0, 270], sizes = [8, 16], strides = [1, 1]} : vector<8x288xf32> to vector<8x16xf32>
    %c0_100 = arith.constant 0 : index
    %c4_101 = arith.constant 4 : index
    %c240 = arith.constant 240 : index
    %141 = vector.load %arg8[%c0_100, %c4_101, %c240] : memref<1x12x256xf32, #tpu.memory_space<vmem>>, vector<1x8x16xf32>
    %142 = vector.shape_cast %141 : vector<1x8x16xf32> to vector<8x16xf32>
    %143 = vector.shape_cast %140 : vector<8x16xf32> to vector<1x8x16xf32>
    tpu.vector_store %arg8[%c0_100, %c4_101, %c240], %143 {strides = array<i32>} : memref<1x12x256xf32, #tpu.memory_space<vmem>>, vector<1x8x16xf32>,
    return
  }
  func.func @transform_0(%arg0: i32) -> (i32, i32, i32) {
    %c0_i32 = arith.constant 0 : i32
    %c0_i32_0 = arith.constant 0 : i32
    %c0_i32_1 = arith.constant 0 : i32
    return %arg0, %c0_i32, %c0_i32_0 : i32, i32, i32
  }
  func.func @transform_1(%arg0: i32) -> (i32, i32) {
    %c0_i32 = arith.constant 0 : i32
    %c0_i32_0 = arith.constant 0 : i32
    %c0_i32_1 = arith.constant 0 : i32
    return %c0_i32, %c0_i32_0 : i32, i32
  }
  func.func @transform_2(%arg0: i32) -> (i32, i32) {
    %c0_i32 = arith.constant 0 : i32
    %c0_i32_0 = arith.constant 0 : i32
    %c0_i32_1 = arith.constant 0 : i32
    return %c0_i32, %c0_i32_0 : i32, i32
  }
  func.func @transform_3(%arg0: i32) -> (i32, i32) {
    %c0_i32 = arith.constant 0 : i32
    %c0_i32_0 = arith.constant 0 : i32
    %c0_i32_1 = arith.constant 0 : i32
    return %c0_i32, %c0_i32_0 : i32, i32
  }
  func.func @transform_4(%arg0: i32) -> (i32, i32) {
    %c0_i32 = arith.constant 0 : i32
    %c0_i32_0 = arith.constant 0 : i32
    %c0_i32_1 = arith.constant 0 : i32
    return %c0_i32, %c0_i32_0 : i32, i32
  }
  func.func @transform_5(%arg0: i32) -> (i32, i32) {
    %c0_i32 = arith.constant 0 : i32
    %c0_i32_0 = arith.constant 0 : i32
    %c0_i32_1 = arith.constant 0 : i32
    return %c0_i32, %c0_i32_0 : i32, i32
  }
  func.func @transform_6(%arg0: i32) -> (i32, i32) {
    %c0_i32 = arith.constant 0 : i32
    %c0_i32_0 = arith.constant 0 : i32
    %c0_i32_1 = arith.constant 0 : i32
    return %c0_i32, %c0_i32_0 : i32, i32
  }
  func.func @transform_7(%arg0: i32) -> (i32, i32, i32) {
    %c0_i32 = arith.constant 0 : i32
    %c0_i32_0 = arith.constant 0 : i32
    %c0_i32_1 = arith.constant 0 : i32
    return %arg0, %c0_i32, %c0_i32_0 : i32, i32, i32
  }
}

</mosaic_0001>

<llo_original>
// kernel: bottleneck_forward.2
$region0: #{bottleneck_forward.2}
  #allocation0 [shape = 'u32[]', space=smem, size = 0x4, offset = 0x4, fixed_abs, tag = 'smem constant byte address 0x4 - core index']
  #allocation1 [shape = 'u32[72,128]{1,0:T(1,128)}', space=vmem, size = 0x9000, scoped, tag = 'internal scratch']
  %s0 = inlined_call_operand.vmem [shape: f32[2,4,256], index: 0, kind: input, shape index: {}]
  %s1 = inlined_call_operand.vmem [shape: f32[4,1], index: 1, kind: input, shape index: {}]
  %s2 = inlined_call_operand.vmem [shape: f32[4,1], index: 2, kind: input, shape index: {}]
  %s3 = inlined_call_operand.vmem [shape: bf16[32,4], index: 3, kind: input, shape index: {}]
  %s4 = inlined_call_operand.vmem [shape: f32[32,1], index: 4, kind: output, shape index: {0}]
  %s5 = inlined_call_operand.vmem [shape: f32[32,1], index: 5, kind: output, shape index: {1}]
  %6 = xla_tuple %s4, %s5
  %s7 = sld [smem:[#allocation0]]
  $region61: #{bottleneck_forward.2} parent=0
    _
  %s9 = ssub.s32 1, %s7
  %s10 = scalar_select 0, %s9, %s7
  loop: start=0, step=1, limit=4
  $region2: #{bottleneck_forward.2} parent=0 // loop_pre_header
    _
  $region3: #{bottleneck_forward.2} parent=0 // loop_header
    %s12 = sphi 0, %s16
    %p13 = scmp.ge.s32.totalorder %s12, 4
    %s22 = sphi 0, %s24
    %s25 = sphi 0, %s22
    %s26 = sphi 0, %s25
    %s42 = sphi 0, %s26
    %s46 = sphi 0, %s46
    %s48 = sphi 0, %s46
    %s49 = sphi 0, %s48
    %s63 = sphi 0, %s49
    %s67 = sphi 0, %s67
    %s69 = sphi 0, %s67
    %s70 = sphi 0, %s69
    %s84 = sphi 0, %s70
    %s88 = sphi 0, %s88
    %s90 = sphi 0, %s88
    %s91 = sphi 0, %s90
    %s105 = sphi 0, %s91
    %s109 = sphi 0, %s109
    %s111 = sphi 0, %s109
    %s112 = sphi 0, %s111
    %s126 = sphi 0, %s112
    %s130 = sphi 0, %s130
    %s132 = sphi 0, %s130
    %s133 = sphi 0, %s132
    %s147 = sphi 0, %s133
  $region4: #{bottleneck_forward.2} parent=0 // loop_header_branch
    %15 = sbr.rel (%p13) target = $region8
  $region5: #{bottleneck_forward.2} parent=0 // loop_body
    %s17 = ssub.s32 %s12, 1
    %s18 = ssub.s32 %s12, 2
    %s19 = sadd.s32 %s12, 1
    %s20 = ssub.s32 %s12, %s19
    %p21 = scmp.eq.s32.totalorder %s20, 0
    %s23 = sadd.s32 %s22, 1
    %s24 = scalar_select %p21, %s22, %s23
    %p27 = pneg %p21
    %p28 = scmp.eq.s32.totalorder %s12, 1
    %p29 = por %p27, %p28
    %p30 = scmp.ne.s32.totalorder %s22, %s25
    %p31 = scmp.eq.s32.totalorder %s12, 0
    %p32 = por %p30, %p31
    %p33 = scmp.ne.s32.totalorder %s22, %s25
    %p34 = scmp.eq.s32.totalorder %s17, 1
    %p35 = por %p33, %p34
    %p36 = scmp.ne.s32.totalorder %s25, %s26
    %p37 = scmp.eq.s32.totalorder %s17, 0
    %p38 = por %p36, %p37
    %p39 = scmp.ne.s32.totalorder %s25, %s26
    %p40 = scmp.eq.s32.totalorder %s18, 1
    %p41 = por %p39, %p40
    %p43 = scmp.ne.s32.totalorder %s26, %s42
    %p44 = scmp.eq.s32.totalorder %s18, 0
    %p45 = por %p43, %p44
    %s47 = sadd.s32 %s46, 1
    %p50 = scmp.eq.s32.totalorder %s12, 1
    %p51 = scmp.ne.s32.totalorder %s46, %s48
    %p52 = scmp.eq.s32.totalorder %s12, 0
    %p53 = por %p51, %p52
    %p54 = scmp.ne.s32.totalorder %s46, %s48
    %p55 = scmp.eq.s32.totalorder %s17, 1
    %p56 = por %p54, %p55
    %p57 = scmp.ne.s32.totalorder %s48, %s49
    %p58 = scmp.eq.s32.totalorder %s17, 0
    %p59 = por %p57, %p58
    %p60 = scmp.ne.s32.totalorder %s48, %s49
    %p61 = scmp.eq.s32.totalorder %s18, 1
    %p62 = por %p60, %p61
    %p64 = scmp.ne.s32.totalorder %s49, %s63
    %p65 = scmp.eq.s32.totalorder %s18, 0
    %p66 = por %p64, %p65
    %s68 = sadd.s32 %s67, 1
    %p71 = scmp.eq.s32.totalorder %s12, 1
    %p72 = scmp.ne.s32.totalorder %s67, %s69
    %p73 = scmp.eq.s32.totalorder %s12, 0
    %p74 = por %p72, %p73
    %p75 = scmp.ne.s32.totalorder %s67, %s69
    %p76 = scmp.eq.s32.totalorder %s17, 1
    %p77 = por %p75, %p76
    %p78 = scmp.ne.s32.totalorder %s69, %s70
    %p79 = scmp.eq.s32.totalorder %s17, 0
    %p80 = por %p78, %p79
    %p81 = scmp.ne.s32.totalorder %s69, %s70
    %p82 = scmp.eq.s32.totalorder %s18, 1
    %p83 = por %p81, %p82
    %p85 = scmp.ne.s32.totalorder %s70, %s84
    %p86 = scmp.eq.s32.totalorder %s18, 0
    %p87 = por %p85, %p86
    %s89 = sadd.s32 %s88, 1
    %p92 = scmp.eq.s32.totalorder %s12, 1
    %p93 = scmp.ne.s32.totalorder %s88, %s90
    %p94 = scmp.eq.s32.totalorder %s12, 0
    %p95 = por %p93, %p94
    %p96 = scmp.ne.s32.totalorder %s88, %s90
    %p97 = scmp.eq.s32.totalorder %s17, 1
    %p98 = por %p96, %p97
    %p99 = scmp.ne.s32.totalorder %s90, %s91
    %p100 = scmp.eq.s32.totalorder %s17, 0
    %p101 = por %p99, %p100
    %p102 = scmp.ne.s32.totalorder %s90, %s91
    %p103 = scmp.eq.s32.totalorder %s18, 1
    %p104 = por %p102, %p103
    %p106 = scmp.ne.s32.totalorder %s91, %s105
    %p107 = scmp.eq.s32.totalorder %s18, 0
    %p108 = por %p106, %p107
    %s110 = sadd.s32 %s109, 1
    %p113 = scmp.eq.s32.totalorder %s12, 1
    %p114 = scmp.ne.s32.totalorder %s109, %s111
    %p115 = scmp.eq.s32.totalorder %s12, 0
    %p116 = por %p114, %p115
    %p117 = scmp.ne.s32.totalorder %s109, %s111
    %p118 = scmp.eq.s32.totalorder %s17, 1
    %p119 = por %p117, %p118
    %p120 = scmp.ne.s32.totalorder %s111, %s112
    %p121 = scmp.eq.s32.totalorder %s17, 0
    %p122 = por %p120, %p121
    %p123 = scmp.ne.s32.totalorder %s111, %s112
    %p124 = scmp.eq.s32.totalorder %s18, 1
    %p125 = por %p123, %p124
    %p127 = scmp.ne.s32.totalorder %s112, %s126
    %p128 = scmp.eq.s32.totalorder %s18, 0
    %p129 = por %p127, %p128
    %s131 = sadd.s32 %s130, 1
    %p134 = scmp.eq.s32.totalorder %s12, 1
    %p135 = scmp.ne.s32.totalorder %s130, %s132
    %p136 = scmp.eq.s32.totalorder %s12, 0
    %p137 = por %p135, %p136
    %p138 = scmp.ne.s32.totalorder %s130, %s132
    %p139 = scmp.eq.s32.totalorder %s17, 1
    %p140 = por %p138, %p139
    %p141 = scmp.ne.s32.totalorder %s132, %s133
    %p142 = scmp.eq.s32.totalorder %s17, 0
    %p143 = por %p141, %p142
    %p144 = scmp.ne.s32.totalorder %s132, %s133
    %p145 = scmp.eq.s32.totalorder %s18, 1
    %p146 = por %p144, %p145
    %p148 = scmp.ne.s32.totalorder %s133, %s147
    %p149 = scmp.eq.s32.totalorder %s18, 0
    %p150 = por %p148, %p149
    %p151 = scmp.le.s32.totalorder 1, %s12
    %p152 = scmp.lt.s32.totalorder %s12, 3
    %p153 = pnand %p151, %p152
    %p154 = pneg %p153
    // Predicated region
    $region9: #{bottleneck_forward.2} parent=5 // pred_check
      _
    $region10: #{bottleneck_forward.2} parent=5 // pred_check_branch
      %156 = sbr.rel (%p153) target = $region12
    $region11: #{bottleneck_forward.2} parent=5 // pred_region
      %s157 = ssub.s32 %s12, 1
      // Predicated region
      $region13: #{bottleneck_forward.2} parent=11 // pred_check
        %p158 = pneg %p59
      $region14: #{bottleneck_forward.2} parent=11 // pred_check_branch
        %160 = sbr.rel (%p158) target = $region16
      $region15: #{bottleneck_forward.2} parent=11 // pred_region
        _
      $region16: #{bottleneck_forward.2} parent=11 // pred_fallthru
        _
      // Predicated region
      $region17: #{bottleneck_forward.2} parent=11 // pred_check
        %p161 = pneg %p80
      $region18: #{bottleneck_forward.2} parent=11 // pred_check_branch
        %163 = sbr.rel (%p161) target = $region20
      $region19: #{bottleneck_forward.2} parent=11 // pred_region
        _
      $region20: #{bottleneck_forward.2} parent=11 // pred_fallthru
        _
      // Predicated region
      $region21: #{bottleneck_forward.2} parent=11 // pred_check
        %p164 = pneg %p101
      $region22: #{bottleneck_forward.2} parent=11 // pred_check_branch
        %166 = sbr.rel (%p164) target = $region24
      $region23: #{bottleneck_forward.2} parent=11 // pred_region
        _
      $region24: #{bottleneck_forward.2} parent=11 // pred_fallthru
        _
    $region12: #{bottleneck_forward.2} parent=5 // pred_fallthru
      _
    %p167 = scmp.lt.s32.totalorder %s12, 2
    // Predicated region
    $region25: #{bottleneck_forward.2} parent=5 // pred_check
      %p168 = pneg %p167
    $region26: #{bottleneck_forward.2} parent=5 // pred_check_branch
      %170 = sbr.rel (%p168) target = $region28
    $region27: #{bottleneck_forward.2} parent=5 // pred_region
      // Predicated region
      $region29: #{bottleneck_forward.2} parent=27 // pred_check
        %p171 = pneg %p32
      $region30: #{bottleneck_forward.2} parent=27 // pred_check_branch
        %173 = sbr.rel (%p171) target = $region32
      $region31: #{bottleneck_forward.2} parent=27 // pred_region
        %p174 = scmp.lt.s32.totalorder %s12, 1
        %s175 = scalar_select %p174, %s12, 1
        %s176 = smul.addr %s175, 2
        %s177 = smul.addr %s176, 4
        %s178 = scalar_lea.vmem %s0, %s177
      $region32: #{bottleneck_forward.2} parent=27 // pred_fallthru
        _
    $region28: #{bottleneck_forward.2} parent=5 // pred_fallthru
      _
    %p179 = scmp.le.s32.totalorder 1, %s12
    %p180 = scmp.lt.s32.totalorder %s12, 3
    %p181 = pnand %p179, %p180
    %p182 = pneg %p181
    // Predicated region
    $region33: #{bottleneck_forward.2} parent=5 // pred_check
      _
    $region34: #{bottleneck_forward.2} parent=5 // pred_check_branch
      %184 = sbr.rel (%p181) target = $region36
    $region35: #{bottleneck_forward.2} parent=5 // pred_region
      %s185 = ssub.s32 %s12, 1
      %p186 = scmp.lt.s32.totalorder %s17, 1
      %s187 = scalar_select %p186, %s17, 1
      %s188 = smul.addr %s187, 2
      %s189 = smul.addr %s188, 4
      %s190 = scalar_lea.vmem %s0, %s189
      %p191 = pneg %p38
      %p192 = pneg %p35
      %p193 = pneg %p59
      %p194 = pneg %p56
      %p195 = pneg %p80
      %p196 = pneg %p77
      %p197 = pneg %p101
      %p198 = pneg %p98
      %p199 = pneg %p122
      %p200 = pneg %p119
      %p201 = pneg %p143
      %p202 = pneg %p140
      %p203 = scmp.lt.s32.totalorder %s17, 1
      %s204 = scalar_select %p203, %s17, 1
      %s205 = smul.addr %s204, 2
      %s206 = smul.addr %s205, 4
      %s207 = scalar_lea.vmem %s0, %s206
      %p209 = scmp.eq.s32.totalorder %s17, 0
      // Predicated region
      $region37: #{bottleneck_forward.2} parent=35 // pred_check
        %p210 = pneg %p209
      $region38: #{bottleneck_forward.2} parent=35 // pred_check_branch
        %212 = sbr.rel (%p210) target = $region40
      $region39: #{bottleneck_forward.2} parent=35 // pred_region
        %vm213 = vcmask 7168
        %214 = vst.msk [vmem:[%s4] sm:$0xff] %vm213, 0.0
        %215 = vst.msk [vmem:[%s4 + $0x8] sm:$0xff] %vm213, 0.0
        %216 = vst.msk [vmem:[%s4 + $0x10] sm:$0xff] %vm213, 0.0
        %217 = vst.msk [vmem:[%s4 + $0x18] sm:$0xff] %vm213, 0.0
        %218 = vst.msk [vmem:[%s5] sm:$0xff] %vm213, 0.0
        %219 = vst.msk [vmem:[%s5 + $0x8] sm:$0xff] %vm213, 0.0
        %220 = vst.msk [vmem:[%s5 + $0x10] sm:$0xff] %vm213, 0.0
        %221 = vst.msk [vmem:[%s5 + $0x18] sm:$0xff] %vm213, 0.0
      $region40: #{bottleneck_forward.2} parent=35 // pred_fallthru
        _
      %v222 = vld [vmem:[%s207] sm:$0xff]
      %v223 = vld [vmem:[%s1] sm:$0xf]
      %225 = vset.pattern.permute.xlu0 0
      %226 = vperm.xlu0 %225, %v223
      %v227 = vpop.permute.xlu0 %226
      %v229 = vunpack.c.l.s4 839922192
      %v230 = vunpack.c.0.s8 %v229
      %v231 = vperm.slane %v227, %v230
      %v233 = vmul.f32 %v222, %v231
      %v234 = vld [vmem:[%s2] sm:$0xf]
      %236 = vset.pattern.permute.xlu0 0
      %237 = vperm.xlu0 %236, %v234
      %v238 = vpop.permute.xlu0 %237
      %v240 = vunpack.c.l.s4 839922192
      %v241 = vunpack.c.0.s8 %v240
      %v242 = vperm.slane %v238, %v241
      %v244 = vadd.f32 %v233, %v242
      %v245 = vmax.f32 %v244, 0.0
      %v246 = vld [vmem:[%s3] sm:$0xf]
      %v247 = vld [vmem:[%s3 + $0x4] sm:$0xf]
      %v248 = vld [vmem:[%s3 + $0x8] sm:$0xf]
      %v249 = vld [vmem:[%s3 + $0xc] sm:$0xf]
      %251 = vst [vmem:[#allocation1] ss:$2 sm:$0xff] %v245
      %v252 = vld.sshfl [vmem:[#allocation1] sm:$0xff pattern:$0x75316420]
      %v253 = vld.sshfl [vmem:[#allocation1 + $0x8] sm:$0xff pattern:$0x75316420]
      %v256 = vpack.c.bf16 %v252, %v252
      %v257 = vpack.c.bf16 %v253, %v253
      %v262 = vunpack.c.l.b16 %v246
      %v263 = vunpack.c.l.b16 %v247
      %v264 = vunpack.c.l.b16 %v248
      %v265 = vunpack.c.l.b16 %v249
      %v266 = vpack.c.b16 %v263, %v262
      %v267 = vpack.c.b16 %v265, %v264
      %vm268 = vcmask 31744
      %v270 = vsel %vm268, %v266, 0
      %v273 = vsel %vm268, %v267, 0
      %vm275 = vcmask 1041408
      %v277 = vsel %vm275, %v256, 0
      %v280 = vsel %vm275, %v257, 0
      %282 = vmatpush.bf16.msra.mxu0 0
      %283 = vmatpush.bf16.msra.mxu0 0
      %284 = vmatpush.bf16.msra.mxu0 0
      %285 = vmatpush.bf16.msra.mxu0 0
      %286 = vmatpush.bf16.msra.mxu0 0
      %287 = vmatpush.bf16.msra.mxu0 0
      %288 = vmatpush.bf16.msra.mxu0 0
      %289 = vmatpush.bf16.msra.mxu0 %v277
      %290 = vmatmul.bf16.gmra.mxu0 %v270
      %v291 = vpop.f32.mrf.mxu0
      %v292 = vadd.f32 0.0, %v291
      %v293 = vpop.f32.mrf.mxu0
      %v294 = vadd.f32 0.0, %v293
      %295 = vmatmul.bf16.gmra.mxu0 %v273
      %v296 = vpop.f32.mrf.mxu0
      %v297 = vadd.f32 0.0, %v296
      %v298 = vpop.f32.mrf.mxu0
      %v299 = vadd.f32 0.0, %v298
      %300 = vdwg.mxu0
      %301 = vmatpush.bf16.msra.mxu0 0
      %302 = vmatpush.bf16.msra.mxu0 0
      %303 = vmatpush.bf16.msra.mxu0 0
      %304 = vmatpush.bf16.msra.mxu0 0
      %305 = vmatpush.bf16.msra.mxu0 0
      %306 = vmatpush.bf16.msra.mxu0 0
      %307 = vmatpush.bf16.msra.mxu0 0
      %308 = vmatpush.bf16.msra.mxu0 %v280
      %309 = vmatmul.bf16.gmra.mxu0 %v270
      %v310 = vpop.f32.mrf.mxu0
      %v311 = vadd.f32 0.0, %v310
      %v312 = vpop.f32.mrf.mxu0
      %v313 = vadd.f32 0.0, %v312
      %314 = vmatmul.bf16.gmra.mxu0 %v273
      %v315 = vpop.f32.mrf.mxu0
      %v316 = vadd.f32 0.0, %v315
      %v317 = vpop.f32.mrf.mxu0
      %v318 = vadd.f32 0.0, %v317
      %319 = vdwg.mxu0
      %v320 = vld [vmem:[%s4] sm:$0xff]
      %v321 = vld [vmem:[%s4 + $0x8] sm:$0xff]
      %v322 = vld [vmem:[%s4 + $0x10] sm:$0xff]
      %v323 = vld [vmem:[%s4 + $0x18] sm:$0xff]
      %v324 = vadd.f32 %v292, %v311
      %325 = vadd.xlane.f32.xlu0 %v324
      %v326 = vpop.xlane.xlu0 %325
      %v327 = vadd.f32 %v294, %v313
      %328 = vadd.xlane.f32.xlu0 %v327
      %v329 = vpop.xlane.xlu0 %328
      %v330 = vadd.f32 %v297, %v316
      %331 = vadd.xlane.f32.xlu0 %v330
      %v332 = vpop.xlane.xlu0 %331
      %v333 = vadd.f32 %v299, %v318
      %334 = vadd.xlane.f32.xlu0 %v333
      %v335 = vpop.xlane.xlu0 %334
      %v336 = vadd.f32 %v320, %v326
      %v337 = vadd.f32 %v321, %v329
      %v338 = vadd.f32 %v322, %v332
      %v339 = vadd.f32 %v323, %v335
      %vm340 = vcmask 7168
      %341 = vst.msk [vmem:[%s4] sm:$0xff] %vm340, %v336
      %342 = vst.msk [vmem:[%s4 + $0x8] sm:$0xff] %vm340, %v337
      %343 = vst.msk [vmem:[%s4 + $0x10] sm:$0xff] %vm340, %v338
      %344 = vst.msk [vmem:[%s4 + $0x18] sm:$0xff] %vm340, %v339
      %v345 = vld [vmem:[%s5] sm:$0xff]
      %v346 = vld [vmem:[%s5 + $0x8] sm:$0xff]
      %v347 = vld [vmem:[%s5 + $0x10] sm:$0xff]
      %v348 = vld [vmem:[%s5 + $0x18] sm:$0xff]
      %v349 = vmul.f32 %v292, %v292
      %v350 = vmul.f32 %v311, %v311
      %v351 = vmul.f32 %v294, %v294
      %v352 = vmul.f32 %v313, %v313
      %v353 = vmul.f32 %v297, %v297
      %v354 = vmul.f32 %v316, %v316
      %v355 = vmul.f32 %v299, %v299
      %v356 = vmul.f32 %v318, %v318
      %v357 = vadd.f32 %v349, %v350
      %358 = vadd.xlane.f32.xlu0 %v357
      %v359 = vpop.xlane.xlu0 %358
      %v360 = vadd.f32 %v351, %v352
      %361 = vadd.xlane.f32.xlu0 %v360
      %v362 = vpop.xlane.xlu0 %361
      %v363 = vadd.f32 %v353, %v354
      %364 = vadd.xlane.f32.xlu0 %v363
      %v365 = vpop.xlane.xlu0 %364
      %v366 = vadd.f32 %v355, %v356
      %367 = vadd.xlane.f32.xlu0 %v366
      %v368 = vpop.xlane.xlu0 %367
      %v369 = vadd.f32 %v345, %v359
      %v370 = vadd.f32 %v346, %v362
      %v371 = vadd.f32 %v347, %v365
      %v372 = vadd.f32 %v348, %v368
      %373 = vst.msk [vmem:[%s5] sm:$0xff] %vm340, %v369
      %374 = vst.msk [vmem:[%s5 + $0x8] sm:$0xff] %vm340, %v370
      %375 = vst.msk [vmem:[%s5 + $0x10] sm:$0xff] %vm340, %v371
      %376 = vst.msk [vmem:[%s5 + $0x18] sm:$0xff] %vm340, %v372
      // Predicated region
      $region41: #{bottleneck_forward.2} parent=35 // pred_check
        %p377 = pneg %p119
      $region42: #{bottleneck_forward.2} parent=35 // pred_check_branch
        %379 = sbr.rel (%p377) target = $region44
      $region43: #{bottleneck_forward.2} parent=35 // pred_region
        _
      $region44: #{bottleneck_forward.2} parent=35 // pred_fallthru
        _
      // Predicated region
      $region45: #{bottleneck_forward.2} parent=35 // pred_check
        %p380 = pneg %p140
      $region46: #{bottleneck_forward.2} parent=35 // pred_check_branch
        %382 = sbr.rel (%p380) target = $region48
      $region47: #{bottleneck_forward.2} parent=35 // pred_region
        _
      $region48: #{bottleneck_forward.2} parent=35 // pred_fallthru
        _
      // Predicated region
      $region49: #{bottleneck_forward.2} parent=35 // pred_check
        %p383 = pneg %p119
      $region50: #{bottleneck_forward.2} parent=35 // pred_check_branch
        %385 = sbr.rel (%p383) target = $region52
      $region51: #{bottleneck_forward.2} parent=35 // pred_region
        _
      $region52: #{bottleneck_forward.2} parent=35 // pred_fallthru
        _
      // Predicated region
      $region53: #{bottleneck_forward.2} parent=35 // pred_check
        %p386 = pneg %p140
      $region54: #{bottleneck_forward.2} parent=35 // pred_check_branch
        %388 = sbr.rel (%p386) target = $region56
      $region55: #{bottleneck_forward.2} parent=35 // pred_region
        _
      $region56: #{bottleneck_forward.2} parent=35 // pred_fallthru
        _
    $region36: #{bottleneck_forward.2} parent=5 // pred_fallthru
      _
    %p389 = scmp.le.s32.totalorder 2, %s12
    // Predicated region
    $region57: #{bottleneck_forward.2} parent=5 // pred_check
      %p390 = pneg %p389
    $region58: #{bottleneck_forward.2} parent=5 // pred_check_branch
      %392 = sbr.rel (%p390) target = $region60
    $region59: #{bottleneck_forward.2} parent=5 // pred_region
      %s393 = ssub.s32 %s12, 2
    $region60: #{bottleneck_forward.2} parent=5 // pred_fallthru
      _
  $region6: #{bottleneck_forward.2} parent=0 // loop_footer
    %s16 = sadd.s32 1, %s12
  $region7: #{bottleneck_forward.2} parent=0 // loop_footer_branch
    %11 = sbr.rel target = $region3
  $region8: #{bottleneck_forward.2} parent=0 // loop_exit
    _

// kernel: bottleneck_forward.3
$region0: #{bottleneck_forward.3}
  #allocation0 [shape = 'u32[]', space=smem, size = 0x4, offset = 0x4, fixed_abs, tag = 'smem constant byte address 0x4 - core index']
  #allocation1 [shape = 'u32[72,128]{1,0:T(1,128)}', space=vmem, size = 0x9000, scoped, tag = 'internal scratch']
  #allocation2 [shape = 'bf16[32,384]{1,0:T(8,128)(2,1)}', space=vmem, size = 0x6000, scoped, tag = 'scratch operand']
  #allocation3 [shape = 'bf16[288,288]{1,0:T(8,128)(2,1)}', space=vmem, size = 0x36000, scoped, tag = 'scratch operand']
  %s0 = inlined_call_operand.vmem [shape: f32[2,4,256], index: 0, kind: input, shape index: {}]
  %s1 = inlined_call_operand.vmem [shape: f32[4,1], index: 1, kind: input, shape index: {}]
  %s2 = inlined_call_operand.vmem [shape: f32[4,1], index: 2, kind: input, shape index: {}]
  %s3 = inlined_call_operand.vmem [shape: f32[32,1], index: 3, kind: input, shape index: {}]
  %s4 = inlined_call_operand.vmem [shape: f32[32,1], index: 4, kind: input, shape index: {}]
  %s5 = inlined_call_operand.vmem [shape: bf16[32,4], index: 5, kind: input, shape index: {}]
  %s6 = inlined_call_operand.vmem [shape: bf16[8,288], index: 6, kind: input, shape index: {}]
  %s7 = inlined_call_operand.vmem [shape: f32[2,12,256], index: 7, kind: output, shape index: {}]
  %s8 = sld [smem:[#allocation0]]
  $region61: #{bottleneck_forward.3} parent=0
    _
  %s10 = ssub.s32 1, %s8
  %s11 = scalar_select 0, %s10, %s8
  loop: start=0, step=1, limit=4
  $region2: #{bottleneck_forward.3} parent=0 // loop_pre_header
    _
  $region3: #{bottleneck_forward.3} parent=0 // loop_header
    %s13 = sphi 0, %s17
    %p14 = scmp.ge.s32.totalorder %s13, 4
    %s23 = sphi 0, %s25
    %s26 = sphi 0, %s23
    %s27 = sphi 0, %s26
    %s43 = sphi 0, %s27
    %s47 = sphi 0, %s47
    %s49 = sphi 0, %s47
    %s50 = sphi 0, %s49
    %s64 = sphi 0, %s50
    %s68 = sphi 0, %s68
    %s70 = sphi 0, %s68
    %s71 = sphi 0, %s70
    %s85 = sphi 0, %s71
    %s89 = sphi 0, %s89
    %s91 = sphi 0, %s89
    %s92 = sphi 0, %s91
    %s106 = sphi 0, %s92
    %s110 = sphi 0, %s110
    %s112 = sphi 0, %s110
    %s113 = sphi 0, %s112
    %s127 = sphi 0, %s113
    %s131 = sphi 0, %s131
    %s133 = sphi 0, %s131
    %s134 = sphi 0, %s133
    %s148 = sphi 0, %s134
    %s152 = sphi 0, %s152
    %s154 = sphi 0, %s152
    %s155 = sphi 0, %s154
    %s169 = sphi 0, %s155
    %s175 = sphi 0, %s177
    %s178 = sphi 0, %s175
    %s179 = sphi 0, %s178
    %s195 = sphi 0, %s179
  $region4: #{bottleneck_forward.3} parent=0 // loop_header_branch
    %16 = sbr.rel (%p14) target = $region8
  $region5: #{bottleneck_forward.3} parent=0 // loop_body
    %s18 = ssub.s32 %s13, 1
    %s19 = ssub.s32 %s13, 2
    %s20 = sadd.s32 %s13, 1
    %s21 = ssub.s32 %s13, %s20
    %p22 = scmp.eq.s32.totalorder %s21, 0
    %s24 = sadd.s32 %s23, 1
    %s25 = scalar_select %p22, %s23, %s24
    %p28 = pneg %p22
    %p29 = scmp.eq.s32.totalorder %s13, 1
    %p30 = por %p28, %p29
    %p31 = scmp.ne.s32.totalorder %s23, %s26
    %p32 = scmp.eq.s32.totalorder %s13, 0
    %p33 = por %p31, %p32
    %p34 = scmp.ne.s32.totalorder %s23, %s26
    %p35 = scmp.eq.s32.totalorder %s18, 1
    %p36 = por %p34, %p35
    %p37 = scmp.ne.s32.totalorder %s26, %s27
    %p38 = scmp.eq.s32.totalorder %s18, 0
    %p39 = por %p37, %p38
    %p40 = scmp.ne.s32.totalorder %s26, %s27
    %p41 = scmp.eq.s32.totalorder %s19, 1
    %p42 = por %p40, %p41
    %p44 = scmp.ne.s32.totalorder %s27, %s43
    %p45 = scmp.eq.s32.totalorder %s19, 0
    %p46 = por %p44, %p45
    %s48 = sadd.s32 %s47, 1
    %p51 = scmp.eq.s32.totalorder %s13, 1
    %p52 = scmp.ne.s32.totalorder %s47, %s49
    %p53 = scmp.eq.s32.totalorder %s13, 0
    %p54 = por %p52, %p53
    %p55 = scmp.ne.s32.totalorder %s47, %s49
    %p56 = scmp.eq.s32.totalorder %s18, 1
    %p57 = por %p55, %p56
    %p58 = scmp.ne.s32.totalorder %s49, %s50
    %p59 = scmp.eq.s32.totalorder %s18, 0
    %p60 = por %p58, %p59
    %p61 = scmp.ne.s32.totalorder %s49, %s50
    %p62 = scmp.eq.s32.totalorder %s19, 1
    %p63 = por %p61, %p62
    %p65 = scmp.ne.s32.totalorder %s50, %s64
    %p66 = scmp.eq.s32.totalorder %s19, 0
    %p67 = por %p65, %p66
    %s69 = sadd.s32 %s68, 1
    %p72 = scmp.eq.s32.totalorder %s13, 1
    %p73 = scmp.ne.s32.totalorder %s68, %s70
    %p74 = scmp.eq.s32.totalorder %s13, 0
    %p75 = por %p73, %p74
    %p76 = scmp.ne.s32.totalorder %s68, %s70
    %p77 = scmp.eq.s32.totalorder %s18, 1
    %p78 = por %p76, %p77
    %p79 = scmp.ne.s32.totalorder %s70, %s71
    %p80 = scmp.eq.s32.totalorder %s18, 0
    %p81 = por %p79, %p80
    %p82 = scmp.ne.s32.totalorder %s70, %s71
    %p83 = scmp.eq.s32.totalorder %s19, 1
    %p84 = por %p82, %p83
    %p86 = scmp.ne.s32.totalorder %s71, %s85
    %p87 = scmp.eq.s32.totalorder %s19, 0
    %p88 = por %p86, %p87
    %s90 = sadd.s32 %s89, 1
    %p93 = scmp.eq.s32.totalorder %s13, 1
    %p94 = scmp.ne.s32.totalorder %s89, %s91
    %p95 = scmp.eq.s32.totalorder %s13, 0
    %p96 = por %p94, %p95
    %p97 = scmp.ne.s32.totalorder %s89, %s91
    %p98 = scmp.eq.s32.totalorder %s18, 1
    %p99 = por %p97, %p98
    %p100 = scmp.ne.s32.totalorder %s91, %s92
    %p101 = scmp.eq.s32.totalorder %s18, 0
    %p102 = por %p100, %p101
    %p103 = scmp.ne.s32.totalorder %s91, %s92
    %p104 = scmp.eq.s32.totalorder %s19, 1
    %p105 = por %p103, %p104
    %p107 = scmp.ne.s32.totalorder %s92, %s106
    %p108 = scmp.eq.s32.totalorder %s19, 0
    %p109 = por %p107, %p108
    %s111 = sadd.s32 %s110, 1
    %p114 = scmp.eq.s32.totalorder %s13, 1
    %p115 = scmp.ne.s32.totalorder %s110, %s112
    %p116 = scmp.eq.s32.totalorder %s13, 0
    %p117 = por %p115, %p116
    %p118 = scmp.ne.s32.totalorder %s110, %s112
    %p119 = scmp.eq.s32.totalorder %s18, 1
    %p120 = por %p118, %p119
    %p121 = scmp.ne.s32.totalorder %s112, %s113
    %p122 = scmp.eq.s32.totalorder %s18, 0
    %p123 = por %p121, %p122
    %p124 = scmp.ne.s32.totalorder %s112, %s113
    %p125 = scmp.eq.s32.totalorder %s19, 1
    %p126 = por %p124, %p125
    %p128 = scmp.ne.s32.totalorder %s113, %s127
    %p129 = scmp.eq.s32.totalorder %s19, 0
    %p130 = por %p128, %p129
    %s132 = sadd.s32 %s131, 1
    %p135 = scmp.eq.s32.totalorder %s13, 1
    %p136 = scmp.ne.s32.totalorder %s131, %s133
    %p137 = scmp.eq.s32.totalorder %s13, 0
    %p138 = por %p136, %p137
    %p139 = scmp.ne.s32.totalorder %s131, %s133
    %p140 = scmp.eq.s32.totalorder %s18, 1
    %p141 = por %p139, %p140
    %p142 = scmp.ne.s32.totalorder %s133, %s134
    %p143 = scmp.eq.s32.totalorder %s18, 0
    %p144 = por %p142, %p143
    %p145 = scmp.ne.s32.totalorder %s133, %s134
    %p146 = scmp.eq.s32.totalorder %s19, 1
    %p147 = por %p145, %p146
    %p149 = scmp.ne.s32.totalorder %s134, %s148
    %p150 = scmp.eq.s32.totalorder %s19, 0
    %p151 = por %p149, %p150
    %s153 = sadd.s32 %s152, 1
    %p156 = scmp.eq.s32.totalorder %s13, 1
    %p157 = scmp.ne.s32.totalorder %s152, %s154
    %p158 = scmp.eq.s32.totalorder %s13, 0
    %p159 = por %p157, %p158
    %p160 = scmp.ne.s32.totalorder %s152, %s154
    %p161 = scmp.eq.s32.totalorder %s18, 1
    %p162 = por %p160, %p161
    %p163 = scmp.ne.s32.totalorder %s154, %s155
    %p164 = scmp.eq.s32.totalorder %s18, 0
    %p165 = por %p163, %p164
    %p166 = scmp.ne.s32.totalorder %s154, %s155
    %p167 = scmp.eq.s32.totalorder %s19, 1
    %p168 = por %p166, %p167
    %p170 = scmp.ne.s32.totalorder %s155, %s169
    %p171 = scmp.eq.s32.totalorder %s19, 0
    %p172 = por %p170, %p171
    %s173 = ssub.s32 %s13, %s20
    %p174 = scmp.eq.s32.totalorder %s173, 0
    %s176 = sadd.s32 %s175, 1
    %s177 = scalar_select %p174, %s175, %s176
    %p180 = pneg %p174
    %p181 = scmp.eq.s32.totalorder %s13, 1
    %p182 = por %p180, %p181
    %p183 = scmp.ne.s32.totalorder %s175, %s178
    %p184 = scmp.eq.s32.totalorder %s13, 0
    %p185 = por %p183, %p184
    %p186 = scmp.ne.s32.totalorder %s175, %s178
    %p187 = scmp.eq.s32.totalorder %s18, 1
    %p188 = por %p186, %p187
    %p189 = scmp.ne.s32.totalorder %s178, %s179
    %p190 = scmp.eq.s32.totalorder %s18, 0
    %p191 = por %p189, %p190
    %p192 = scmp.ne.s32.totalorder %s178, %s179
    %p193 = scmp.eq.s32.totalorder %s19, 1
    %p194 = por %p192, %p193
    %p196 = scmp.ne.s32.totalorder %s179, %s195
    %p197 = scmp.eq.s32.totalorder %s19, 0
    %p198 = por %p196, %p197
    %p199 = scmp.le.s32.totalorder 1, %s13
    %p200 = scmp.lt.s32.totalorder %s13, 3
    %p201 = pnand %p199, %p200
    %p202 = pneg %p201
    // Predicated region
    $region9: #{bottleneck_forward.3} parent=5 // pred_check
      _
    $region10: #{bottleneck_forward.3} parent=5 // pred_check_branch
      %204 = sbr.rel (%p201) target = $region12
    $region11: #{bottleneck_forward.3} parent=5 // pred_region
      %s205 = ssub.s32 %s13, 1
      // Predicated region
      $region13: #{bottleneck_forward.3} parent=11 // pred_check
        %p206 = pneg %p60
      $region14: #{bottleneck_forward.3} parent=11 // pred_check_branch
        %208 = sbr.rel (%p206) target = $region16
      $region15: #{bottleneck_forward.3} parent=11 // pred_region
        _
      $region16: #{bottleneck_forward.3} parent=11 // pred_fallthru
        _
      // Predicated region
      $region17: #{bottleneck_forward.3} parent=11 // pred_check
        %p209 = pneg %p81
      $region18: #{bottleneck_forward.3} parent=11 // pred_check_branch
        %211 = sbr.rel (%p209) target = $region20
      $region19: #{bottleneck_forward.3} parent=11 // pred_region
        _
      $region20: #{bottleneck_forward.3} parent=11 // pred_fallthru
        _
      // Predicated region
      $region21: #{bottleneck_forward.3} parent=11 // pred_check
        %p212 = pneg %p102
      $region22: #{bottleneck_forward.3} parent=11 // pred_check_branch
        %214 = sbr.rel (%p212) target = $region24
      $region23: #{bottleneck_forward.3} parent=11 // pred_region
        _
      $region24: #{bottleneck_forward.3} parent=11 // pred_fallthru
        _
      // Predicated region
      $region25: #{bottleneck_forward.3} parent=11 // pred_check
        %p215 = pneg %p123
      $region26: #{bottleneck_forward.3} parent=11 // pred_check_branch
        %217 = sbr.rel (%p215) target = $region28
      $region27: #{bottleneck_forward.3} parent=11 // pred_region
        _
      $region28: #{bottleneck_forward.3} parent=11 // pred_fallthru
        _
      // Predicated region
      $region29: #{bottleneck_forward.3} parent=11 // pred_check
        %p218 = pneg %p144
      $region30: #{bottleneck_forward.3} parent=11 // pred_check_branch
        %220 = sbr.rel (%p218) target = $region32
      $region31: #{bottleneck_forward.3} parent=11 // pred_region
        _
      $region32: #{bottleneck_forward.3} parent=11 // pred_fallthru
        _
      // Predicated region
      $region33: #{bottleneck_forward.3} parent=11 // pred_check
        %p221 = pneg %p165
      $region34: #{bottleneck_forward.3} parent=11 // pred_check_branch
        %223 = sbr.rel (%p221) target = $region36
      $region35: #{bottleneck_forward.3} parent=11 // pred_region
        _
      $region36: #{bottleneck_forward.3} parent=11 // pred_fallthru
        _
    $region12: #{bottleneck_forward.3} parent=5 // pred_fallthru
      _
    %p224 = scmp.lt.s32.totalorder %s13, 2
    // Predicated region
    $region37: #{bottleneck_forward.3} parent=5 // pred_check
      %p225 = pneg %p224
    $region38: #{bottleneck_forward.3} parent=5 // pred_check_branch
      %227 = sbr.rel (%p225) target = $region40
    $region39: #{bottleneck_forward.3} parent=5 // pred_region
      // Predicated region
      $region41: #{bottleneck_forward.3} parent=39 // pred_check
        %p228 = pneg %p33
      $region42: #{bottleneck_forward.3} parent=39 // pred_check_branch
        %230 = sbr.rel (%p228) target = $region44
      $region43: #{bottleneck_forward.3} parent=39 // pred_region
        %p231 = scmp.lt.s32.totalorder %s13, 1
        %s232 = scalar_select %p231, %s13, 1
        %s233 = smul.addr %s232, 2
        %s234 = smul.addr %s233, 4
        %s235 = scalar_lea.vmem %s0, %s234
      $region44: #{bottleneck_forward.3} parent=39 // pred_fallthru
        _
    $region40: #{bottleneck_forward.3} parent=5 // pred_fallthru
      _
    %p236 = scmp.le.s32.totalorder 1, %s13
    %p237 = scmp.lt.s32.totalorder %s13, 3
    %p238 = pnand %p236, %p237
    %p239 = pneg %p238
    // Predicated region
    $region45: #{bottleneck_forward.3} parent=5 // pred_check
      _
    $region46: #{bottleneck_forward.3} parent=5 // pred_check_branch
      %241 = sbr.rel (%p238) target = $region48
    $region47: #{bottleneck_forward.3} parent=5 // pred_region
      %s242 = ssub.s32 %s13, 1
      %p243 = scmp.lt.s32.totalorder %s18, 1
      %s244 = scalar_select %p243, %s18, 1
      %s245 = smul.addr %s244, 2
      %s246 = smul.addr %s245, 4
      %s247 = scalar_lea.vmem %s0, %s246
      %p248 = pneg %p39
      %p249 = pneg %p36
      %p250 = pneg %p60
      %p251 = pneg %p57
      %p252 = pneg %p81
      %p253 = pneg %p78
      %p254 = pneg %p102
      %p255 = pneg %p99
      %p256 = pneg %p123
      %p257 = pneg %p120
      %p258 = pneg %p144
      %p259 = pneg %p141
      %p260 = pneg %p165
      %p261 = pneg %p162
      %p262 = pneg %p191
      %p263 = pneg %p188
      %p264 = scmp.lt.s32.totalorder %s18, 1
      %s265 = scalar_select %p264, %s18, 1
      %s266 = smul.addr %s265, 4
      %s267 = smul.addr %s266, 8
      %s268 = scalar_lea.vmem %s7, %s267
      %p269 = scmp.lt.s32.totalorder %s18, 1
      %s270 = scalar_select %p269, %s18, 1
      %s271 = smul.addr %s270, 2
      %s272 = smul.addr %s271, 4
      %s273 = scalar_lea.vmem %s0, %s272
      %p274 = scmp.lt.s32.totalorder %s18, 1
      %s275 = scalar_select %p274, %s18, 1
      %s276 = smul.addr %s275, 4
      %s277 = smul.addr %s276, 8
      %s278 = scalar_lea.vmem %s7, %s277
      %v280 = vld [vmem:[%s273] sm:$0xff]
      %v281 = vld [vmem:[%s1] sm:$0xf]
      %283 = vset.pattern.permute.xlu0 0
      %284 = vperm.xlu0 %283, %v281
      %v285 = vpop.permute.xlu0 %284
      %v287 = vunpack.c.l.s4 839922192
      %v288 = vunpack.c.0.s8 %v287
      %v289 = vperm.slane %v285, %v288
      %v291 = vmul.f32 %v280, %v289
      %v292 = vld [vmem:[%s2] sm:$0xf]
      %294 = vset.pattern.permute.xlu0 0
      %295 = vperm.xlu0 %294, %v292
      %v296 = vpop.permute.xlu0 %295
      %v298 = vunpack.c.l.s4 839922192
      %v299 = vunpack.c.0.s8 %v298
      %v300 = vperm.slane %v296, %v299
      %v302 = vadd.f32 %v291, %v300
      %v303 = vmax.f32 %v302, 0.0
      %v304 = vld [vmem:[%s5] sm:$0xf]
      %v305 = vld [vmem:[%s5 + $0x4] sm:$0xf]
      %v306 = vld [vmem:[%s5 + $0x8] sm:$0xf]
      %v307 = vld [vmem:[%s5 + $0xc] sm:$0xf]
      %309 = vst [vmem:[#allocation1] ss:$2 sm:$0xff] %v303
      %v310 = vld.sshfl [vmem:[#allocation1] sm:$0xff pattern:$0x75316420]
      %v311 = vld.sshfl [vmem:[#allocation1 + $0x8] sm:$0xff pattern:$0x75316420]
      %v314 = vpack.c.bf16 %v310, %v310
      %v315 = vpack.c.bf16 %v311, %v311
      %v320 = vunpack.c.l.b16 %v304
      %v321 = vunpack.c.l.b16 %v305
      %v322 = vunpack.c.l.b16 %v306
      %v323 = vunpack.c.l.b16 %v307
      %v324 = vpack.c.b16 %v321, %v320
      %v325 = vpack.c.b16 %v323, %v322
      %vm326 = vcmask 31744
      %v328 = vsel %vm326, %v324, 0
      %v331 = vsel %vm326, %v325, 0
      %vm333 = vcmask 1041408
      %v335 = vsel %vm333, %v314, 0
      %v338 = vsel %vm333, %v315, 0
      %340 = vmatpush.bf16.msra.mxu0 0
      %341 = vmatpush.bf16.msra.mxu0 0
      %342 = vmatpush.bf16.msra.mxu0 0
      %343 = vmatpush.bf16.msra.mxu0 0
      %344 = vmatpush.bf16.msra.mxu0 0
      %345 = vmatpush.bf16.msra.mxu0 0
      %346 = vmatpush.bf16.msra.mxu0 0
      %347 = vmatpush.bf16.msra.mxu0 %v335
      %348 = vmatmul.bf16.gmra.mxu0 %v328
      %v349 = vpop.f32.mrf.mxu0
      %v350 = vadd.f32 0.0, %v349
      %v351 = vpop.f32.mrf.mxu0
      %v352 = vadd.f32 0.0, %v351
      %353 = vmatmul.bf16.gmra.mxu0 %v331
      %v354 = vpop.f32.mrf.mxu0
      %v355 = vadd.f32 0.0, %v354
      %v356 = vpop.f32.mrf.mxu0
      %v357 = vadd.f32 0.0, %v356
      %358 = vdwg.mxu0
      %359 = vmatpush.bf16.msra.mxu0 0
      %360 = vmatpush.bf16.msra.mxu0 0
      %361 = vmatpush.bf16.msra.mxu0 0
      %362 = vmatpush.bf16.msra.mxu0 0
      %363 = vmatpush.bf16.msra.mxu0 0
      %364 = vmatpush.bf16.msra.mxu0 0
      %365 = vmatpush.bf16.msra.mxu0 0
      %366 = vmatpush.bf16.msra.mxu0 %v338
      %367 = vmatmul.bf16.gmra.mxu0 %v328
      %v368 = vpop.f32.mrf.mxu0
      %v369 = vadd.f32 0.0, %v368
      %v370 = vpop.f32.mrf.mxu0
      %v371 = vadd.f32 0.0, %v370
      %372 = vmatmul.bf16.gmra.mxu0 %v331
      %v373 = vpop.f32.mrf.mxu0
      %v374 = vadd.f32 0.0, %v373
      %v375 = vpop.f32.mrf.mxu0
      %v376 = vadd.f32 0.0, %v375
      %377 = vdwg.mxu0
      %v378 = vld [vmem:[%s3] sm:$0xff]
      %v379 = vld [vmem:[%s3 + $0x8] sm:$0xff]
      %v380 = vld [vmem:[%s3 + $0x10] sm:$0xff]
      %v381 = vld [vmem:[%s3 + $0x18] sm:$0xff]
      %383 = vset.pattern.permute.xlu0 0
      %384 = vperm.xlu0 %383, %v378
      %v385 = vpop.permute.xlu0 %384
      %388 = vset.pattern.permute.xlu0 0
      %389 = vperm.xlu0 %388, %v379
      %v390 = vpop.permute.xlu0 %389
      %393 = vset.pattern.permute.xlu0 0
      %394 = vperm.xlu0 %393, %v380
      %v395 = vpop.permute.xlu0 %394
      %398 = vset.pattern.permute.xlu0 0
      %399 = vperm.xlu0 %398, %v381
      %v400 = vpop.permute.xlu0 %399
      %v402 = vmul.f32 %v350, %v385
      %v403 = vmul.f32 %v369, %v385
      %v404 = vmul.f32 %v352, %v390
      %v405 = vmul.f32 %v371, %v390
      %v406 = vmul.f32 %v355, %v395
      %v407 = vmul.f32 %v374, %v395
      %v408 = vmul.f32 %v357, %v400
      %v409 = vmul.f32 %v376, %v400
      %v410 = vld [vmem:[%s4] sm:$0xff]
      %v411 = vld [vmem:[%s4 + $0x8] sm:$0xff]
      %v412 = vld [vmem:[%s4 + $0x10] sm:$0xff]
      %v413 = vld [vmem:[%s4 + $0x18] sm:$0xff]
      %415 = vset.pattern.permute.xlu0 0
      %416 = vperm.xlu0 %415, %v410
      %v417 = vpop.permute.xlu0 %416
      %420 = vset.pattern.permute.xlu0 0
      %421 = vperm.xlu0 %420, %v411
      %v422 = vpop.permute.xlu0 %421
      %425 = vset.pattern.permute.xlu0 0
      %426 = vperm.xlu0 %425, %v412
      %v427 = vpop.permute.xlu0 %426
      %430 = vset.pattern.permute.xlu0 0
      %431 = vperm.xlu0 %430, %v413
      %v432 = vpop.permute.xlu0 %431
      %v434 = vadd.f32 %v402, %v417
      %v435 = vadd.f32 %v403, %v417
      %v436 = vadd.f32 %v404, %v422
      %v437 = vadd.f32 %v405, %v422
      %v438 = vadd.f32 %v406, %v427
      %v439 = vadd.f32 %v407, %v427
      %v440 = vadd.f32 %v408, %v432
      %v441 = vadd.f32 %v409, %v432
      %v442 = vmax.f32 %v434, 0.0
      %v443 = vmax.f32 %v435, 0.0
      %v444 = vmax.f32 %v436, 0.0
      %v445 = vmax.f32 %v437, 0.0
      %v446 = vmax.f32 %v438, 0.0
      %v447 = vmax.f32 %v439, 0.0
      %v448 = vmax.f32 %v440, 0.0
      %v449 = vmax.f32 %v441, 0.0
      %v450 = vpack.c.bf16 %v443, %v442
      %v451 = vpack.c.bf16 %v445, %v444
      %v452 = vpack.c.bf16 %v447, %v446
      %v453 = vpack.c.bf16 %v449, %v448
      %454 = vst [vmem:[#allocation2] sm:$0xff] 0
      %455 = vst [vmem:[#allocation2 + $0x8] sm:$0xf] 0
      %456 = vst [vmem:[#allocation2 + $0xc] sm:$0xff] 0
      %457 = vst [vmem:[#allocation2 + $0x14] sm:$0xf] 0
      %458 = vst [vmem:[#allocation2 + $0x18] sm:$0xff] 0
      %459 = vst [vmem:[#allocation2 + $0x20] sm:$0xf] 0
      %460 = vst [vmem:[#allocation2 + $0x24] sm:$0xff] 0
      %461 = vst [vmem:[#allocation2 + $0x2c] sm:$0xf] 0
      %466 = vrot.lane.b32.xlu0 %v450, 19
      %v467 = vpop.permute.xlu0 %466
      %468 = vrot.lane.b32.xlu0 %v451, 19
      %v469 = vpop.permute.xlu0 %468
      %470 = vrot.lane.b32.xlu0 %v452, 19
      %v471 = vpop.permute.xlu0 %470
      %472 = vrot.lane.b32.xlu0 %v453, 19
      %v473 = vpop.permute.xlu0 %472
      %vm478 = vcmask 281752
      %479 = vst.msk [vmem:[#allocation2] sm:$0xf] %vm478, %v467
      %480 = vst.msk [vmem:[#allocation2 + $0xc] sm:$0xf] %vm478, %v469
      %481 = vst.msk [vmem:[#allocation2 + $0x18] sm:$0xf] %vm478, %v471
      %482 = vst.msk [vmem:[#allocation2 + $0x24] sm:$0xf] %vm478, %v473
      %483 = vrot.lane.b32.xlu0 %v450, 21
      %v484 = vpop.permute.xlu0 %483
      %485 = vrot.lane.b32.xlu0 %v451, 21
      %v486 = vpop.permute.xlu0 %485
      %487 = vrot.lane.b32.xlu0 %v452, 21
      %v488 = vpop.permute.xlu0 %487
      %489 = vrot.lane.b32.xlu0 %v453, 21
      %v490 = vpop.permute.xlu0 %489
      %vm495 = vcmask 429352
      %496 = vst.msk [vmem:[#allocation2] sm:$0xf] %vm495, %v484
      %497 = vst.msk [vmem:[#allocation2 + $0xc] sm:$0xf] %vm495, %v486
      %498 = vst.msk [vmem:[#allocation2 + $0x18] sm:$0xf] %vm495, %v488
      %499 = vst.msk [vmem:[#allocation2 + $0x24] sm:$0xf] %vm495, %v490
      %500 = vrot.lane.b32.xlu0 %v450, 23
      %v501 = vpop.permute.xlu0 %500
      %502 = vrot.lane.b32.xlu0 %v451, 23
      %v503 = vpop.permute.xlu0 %502
      %504 = vrot.lane.b32.xlu0 %v452, 23
      %v505 = vpop.permute.xlu0 %504
      %506 = vrot.lane.b32.xlu0 %v453, 23
      %v507 = vpop.permute.xlu0 %506
      %vm512 = vcmask 576952
      %513 = vst.msk [vmem:[#allocation2] sm:$0xf] %vm512, %v501
      %514 = vst.msk [vmem:[#allocation2 + $0xc] sm:$0xf] %vm512, %v503
      %515 = vst.msk [vmem:[#allocation2 + $0x18] sm:$0xf] %vm512, %v505
      %516 = vst.msk [vmem:[#allocation2 + $0x24] sm:$0xf] %vm512, %v507
      %517 = vrot.lane.b32.xlu0 %v450, 25
      %v518 = vpop.permute.xlu0 %517
      %519 = vrot.lane.b32.xlu0 %v451, 25
      %v520 = vpop.permute.xlu0 %519
      %521 = vrot.lane.b32.xlu0 %v452, 25
      %v522 = vpop.permute.xlu0 %521
      %523 = vrot.lane.b32.xlu0 %v453, 25
      %v524 = vpop.permute.xlu0 %523
      %vm529 = vcmask 724552
      %530 = vst.msk [vmem:[#allocation2] sm:$0xf] %vm529, %v518
      %531 = vst.msk [vmem:[#allocation2 + $0xc] sm:$0xf] %vm529, %v520
      %532 = vst.msk [vmem:[#allocation2 + $0x18] sm:$0xf] %vm529, %v522
      %533 = vst.msk [vmem:[#allocation2 + $0x24] sm:$0xf] %vm529, %v524
      %534 = vrot.lane.b32.xlu0 %v450, 27
      %v535 = vpop.permute.xlu0 %534
      %536 = vrot.lane.b32.xlu0 %v451, 27
      %v537 = vpop.permute.xlu0 %536
      %538 = vrot.lane.b32.xlu0 %v452, 27
      %v539 = vpop.permute.xlu0 %538
      %540 = vrot.lane.b32.xlu0 %v453, 27
      %v541 = vpop.permute.xlu0 %540
      %vm546 = vcmask 872152
      %547 = vst.msk [vmem:[#allocation2] sm:$0xf] %vm546, %v535
      %548 = vst.msk [vmem:[#allocation2 + $0xc] sm:$0xf] %vm546, %v537
      %549 = vst.msk [vmem:[#allocation2 + $0x18] sm:$0xf] %vm546, %v539
      %550 = vst.msk [vmem:[#allocation2 + $0x24] sm:$0xf] %vm546, %v541
      %551 = vrot.lane.b32.xlu0 %v450, 29
      %v552 = vpop.permute.xlu0 %551
      %553 = vrot.lane.b32.xlu0 %v451, 29
      %v554 = vpop.permute.xlu0 %553
      %555 = vrot.lane.b32.xlu0 %v452, 29
      %v556 = vpop.permute.xlu0 %555
      %557 = vrot.lane.b32.xlu0 %v453, 29
      %v558 = vpop.permute.xlu0 %557
      %vm563 = vcmask 1019752
      %564 = vst.msk [vmem:[#allocation2] sm:$0xf] %vm563, %v552
      %565 = vst.msk [vmem:[#allocation2 + $0xc] sm:$0xf] %vm563, %v554
      %566 = vst.msk [vmem:[#allocation2 + $0x18] sm:$0xf] %vm563, %v556
      %567 = vst.msk [vmem:[#allocation2 + $0x24] sm:$0xf] %vm563, %v558
      %568 = vrot.lane.b32.xlu0 %v450, 31
      %v569 = vpop.permute.xlu0 %568
      %570 = vrot.lane.b32.xlu0 %v451, 31
      %v571 = vpop.permute.xlu0 %570
      %572 = vrot.lane.b32.xlu0 %v452, 31
      %v573 = vpop.permute.xlu0 %572
      %574 = vrot.lane.b32.xlu0 %v453, 31
      %v575 = vpop.permute.xlu0 %574
      %v576 = vrot.slane %v569, 4
      %v577 = vrot.slane %v571, 4
      %v578 = vrot.slane %v573, 4
      %v579 = vrot.slane %v575, 4
      %vm580 = vcmask 252928
      %v581 = vsel %vm580, %v576, %v569
      %v582 = vsel %vm580, %v577, %v571
      %v583 = vsel %vm580, %v578, %v573
      %v584 = vsel %vm580, %v579, %v575
      %vm589 = vcmask 1044472
      %vm590 = vcmask 121860
      %vm591 = vmor %vm590, %vm589
      %592 = vst.msk [vmem:[#allocation2] sm:$0xff] %vm591, %v581
      %593 = vst.msk [vmem:[#allocation2 + $0xc] sm:$0xff] %vm591, %v582
      %594 = vst.msk [vmem:[#allocation2 + $0x18] sm:$0xff] %vm591, %v583
      %595 = vst.msk [vmem:[#allocation2 + $0x24] sm:$0xff] %vm591, %v584
      %596 = vrot.lane.b32.xlu0 %v450, 33
      %v597 = vpop.permute.xlu0 %596
      %598 = vrot.lane.b32.xlu0 %v451, 33
      %v599 = vpop.permute.xlu0 %598
      %600 = vrot.lane.b32.xlu0 %v452, 33
      %v601 = vpop.permute.xlu0 %600
      %602 = vrot.lane.b32.xlu0 %v453, 33
      %v603 = vpop.permute.xlu0 %602
      %vm608 = vcmask 265352
      %609 = vst.msk [vmem:[#allocation2 + $0x4] sm:$0xf] %vm608, %v597
      %610 = vst.msk [vmem:[#allocation2 + $0x10] sm:$0xf] %vm608, %v599
      %611 = vst.msk [vmem:[#allocation2 + $0x1c] sm:$0xf] %vm608, %v601
      %612 = vst.msk [vmem:[#allocation2 + $0x28] sm:$0xf] %vm608, %v603
      %613 = vrot.lane.b32.xlu0 %v450, 35
      %v614 = vpop.permute.xlu0 %613
      %615 = vrot.lane.b32.xlu0 %v451, 35
      %v616 = vpop.permute.xlu0 %615
      %617 = vrot.lane.b32.xlu0 %v452, 35
      %v618 = vpop.permute.xlu0 %617
      %619 = vrot.lane.b32.xlu0 %v453, 35
      %v620 = vpop.permute.xlu0 %619
      %v621 = vrot.slane %v614, 4
      %v622 = vrot.slane %v616, 4
      %v623 = vrot.slane %v618, 4
      %v624 = vrot.slane %v620, 4
      %vm625 = vcmask 285696
      %v626 = vsel %vm625, %v614, %v621
      %v627 = vsel %vm625, %v616, %v622
      %v628 = vsel %vm625, %v618, %v623
      %v629 = vsel %vm625, %v620, %v624
      %vm634 = vcmask 412952
      %635 = vst.msk [vmem:[#allocation2 + $0x4] sm:$0xf] %vm634, %v626
      %636 = vst.msk [vmem:[#allocation2 + $0x10] sm:$0xf] %vm634, %v627
      %637 = vst.msk [vmem:[#allocation2 + $0x1c] sm:$0xf] %vm634, %v628
      %638 = vst.msk [vmem:[#allocation2 + $0x28] sm:$0xf] %vm634, %v629
      %639 = vrot.lane.b32.xlu0 %v450, 37
      %v640 = vpop.permute.xlu0 %639
      %641 = vrot.lane.b32.xlu0 %v451, 37
      %v642 = vpop.permute.xlu0 %641
      %643 = vrot.lane.b32.xlu0 %v452, 37
      %v644 = vpop.permute.xlu0 %643
      %645 = vrot.lane.b32.xlu0 %v453, 37
      %v646 = vpop.permute.xlu0 %645
      %v647 = vrot.slane %v640, 4
      %v648 = vrot.slane %v642, 4
      %v649 = vrot.slane %v644, 4
      %v650 = vrot.slane %v646, 4
      %vm651 = vcmask 302080
      %v652 = vsel %vm651, %v640, %v647
      %v653 = vsel %vm651, %v642, %v648
      %v654 = vsel %vm651, %v644, %v649
      %v655 = vsel %vm651, %v646, %v650
      %vm660 = vcmask 560552
      %661 = vst.msk [vmem:[#allocation2 + $0x4] sm:$0xf] %vm660, %v652
      %662 = vst.msk [vmem:[#allocation2 + $0x10] sm:$0xf] %vm660, %v653
      %663 = vst.msk [vmem:[#allocation2 + $0x1c] sm:$0xf] %vm660, %v654
      %664 = vst.msk [vmem:[#allocation2 + $0x28] sm:$0xf] %vm660, %v655
      %665 = vrot.lane.b32.xlu0 %v450, 39
      %v666 = vpop.permute.xlu0 %665
      %667 = vrot.lane.b32.xlu0 %v451, 39
      %v668 = vpop.permute.xlu0 %667
      %669 = vrot.lane.b32.xlu0 %v452, 39
      %v670 = vpop.permute.xlu0 %669
      %671 = vrot.lane.b32.xlu0 %v453, 39
      %v672 = vpop.permute.xlu0 %671
      %v673 = vrot.slane %v666, 4
      %v674 = vrot.slane %v668, 4
      %v675 = vrot.slane %v670, 4
      %v676 = vrot.slane %v672, 4
      %vm677 = vcmask 318464
      %v678 = vsel %vm677, %v666, %v673
      %v679 = vsel %vm677, %v668, %v674
      %v680 = vsel %vm677, %v670, %v675
      %v681 = vsel %vm677, %v672, %v676
      %vm686 = vcmask 708152
      %687 = vst.msk [vmem:[#allocation2 + $0x4] sm:$0xf] %vm686, %v678
      %688 = vst.msk [vmem:[#allocation2 + $0x10] sm:$0xf] %vm686, %v679
      %689 = vst.msk [vmem:[#allocation2 + $0x1c] sm:$0xf] %vm686, %v680
      %690 = vst.msk [vmem:[#allocation2 + $0x28] sm:$0xf] %vm686, %v681
      %691 = vrot.lane.b32.xlu0 %v450, 41
      %v692 = vpop.permute.xlu0 %691
      %693 = vrot.lane.b32.xlu0 %v451, 41
      %v694 = vpop.permute.xlu0 %693
      %695 = vrot.lane.b32.xlu0 %v452, 41
      %v696 = vpop.permute.xlu0 %695
      %697 = vrot.lane.b32.xlu0 %v453, 41
      %v698 = vpop.permute.xlu0 %697
      %v699 = vrot.slane %v692, 4
      %v700 = vrot.slane %v694, 4
      %v701 = vrot.slane %v696, 4
      %v702 = vrot.slane %v698, 4
      %vm703 = vcmask 334848
      %v704 = vsel %vm703, %v692, %v699
      %v705 = vsel %vm703, %v694, %v700
      %v706 = vsel %vm703, %v696, %v701
      %v707 = vsel %vm703, %v698, %v702
      %vm712 = vcmask 855752
      %713 = vst.msk [vmem:[#allocation2 + $0x4] sm:$0xf] %vm712, %v704
      %714 = vst.msk [vmem:[#allocation2 + $0x10] sm:$0xf] %vm712, %v705
      %715 = vst.msk [vmem:[#allocation2 + $0x1c] sm:$0xf] %vm712, %v706
      %716 = vst.msk [vmem:[#allocation2 + $0x28] sm:$0xf] %vm712, %v707
      %717 = vrot.lane.b32.xlu0 %v450, 43
      %v718 = vpop.permute.xlu0 %717
      %719 = vrot.lane.b32.xlu0 %v451, 43
      %v720 = vpop.permute.xlu0 %719
      %721 = vrot.lane.b32.xlu0 %v452, 43
      %v722 = vpop.permute.xlu0 %721
      %723 = vrot.lane.b32.xlu0 %v453, 43
      %v724 = vpop.permute.xlu0 %723
      %v725 = vrot.slane %v718, 4
      %v726 = vrot.slane %v720, 4
      %v727 = vrot.slane %v722, 4
      %v728 = vrot.slane %v724, 4
      %vm729 = vcmask 351232
      %v730 = vsel %vm729, %v718, %v725
      %v731 = vsel %vm729, %v720, %v726
      %v732 = vsel %vm729, %v722, %v727
      %v733 = vsel %vm729, %v724, %v728
      %vm738 = vcmask 1003352
      %739 = vst.msk [vmem:[#allocation2 + $0x4] sm:$0xf] %vm738, %v730
      %740 = vst.msk [vmem:[#allocation2 + $0x10] sm:$0xf] %vm738, %v731
      %741 = vst.msk [vmem:[#allocation2 + $0x1c] sm:$0xf] %vm738, %v732
      %742 = vst.msk [vmem:[#allocation2 + $0x28] sm:$0xf] %vm738, %v733
      %743 = vrot.lane.b32.xlu0 %v450, 45
      %v744 = vpop.permute.xlu0 %743
      %745 = vrot.lane.b32.xlu0 %v451, 45
      %v746 = vpop.permute.xlu0 %745
      %747 = vrot.lane.b32.xlu0 %v452, 45
      %v748 = vpop.permute.xlu0 %747
      %749 = vrot.lane.b32.xlu0 %v453, 45
      %v750 = vpop.permute.xlu0 %749
      %v751 = vrot.slane %v744, 4
      %v752 = vrot.slane %v746, 4
      %v753 = vrot.slane %v748, 4
      %v754 = vrot.slane %v750, 4
      %vm755 = vcmask 367616
      %v756 = vsel %vm755, %v744, %v751
      %v757 = vsel %vm755, %v746, %v752
      %v758 = vsel %vm755, %v748, %v753
      %v759 = vsel %vm755, %v750, %v754
      %vm764 = vcmask 1044456
      %vm765 = vcmask 105476
      %vm766 = vmor %vm765, %vm764
      %767 = vst.msk [vmem:[#allocation2 + $0x4] sm:$0xff] %vm766, %v756
      %768 = vst.msk [vmem:[#allocation2 + $0x10] sm:$0xff] %vm766, %v757
      %769 = vst.msk [vmem:[#allocation2 + $0x1c] sm:$0xff] %vm766, %v758
      %770 = vst.msk [vmem:[#allocation2 + $0x28] sm:$0xff] %vm766, %v759
      %771 = vrot.lane.b32.xlu0 %v450, 47
      %v772 = vpop.permute.xlu0 %771
      %773 = vrot.lane.b32.xlu0 %v451, 47
      %v774 = vpop.permute.xlu0 %773
      %775 = vrot.lane.b32.xlu0 %v452, 47
      %v776 = vpop.permute.xlu0 %775
      %777 = vrot.lane.b32.xlu0 %v453, 47
      %v778 = vpop.permute.xlu0 %777
      %v779 = vrot.slane %v772, 4
      %v780 = vrot.slane %v774, 4
      %v781 = vrot.slane %v776, 4
      %v782 = vrot.slane %v778, 4
      %vm787 = vcmask 248952
      %788 = vst.msk [vmem:[#allocation2 + $0x8] sm:$0xf] %vm787, %v779
      %789 = vst.msk [vmem:[#allocation2 + $0x14] sm:$0xf] %vm787, %v780
      %790 = vst.msk [vmem:[#allocation2 + $0x20] sm:$0xf] %vm787, %v781
      %791 = vst.msk [vmem:[#allocation2 + $0x2c] sm:$0xf] %vm787, %v782
      %792 = vrot.lane.b32.xlu0 %v450, 49
      %v793 = vpop.permute.xlu0 %792
      %794 = vrot.lane.b32.xlu0 %v451, 49
      %v795 = vpop.permute.xlu0 %794
      %796 = vrot.lane.b32.xlu0 %v452, 49
      %v797 = vpop.permute.xlu0 %796
      %798 = vrot.lane.b32.xlu0 %v453, 49
      %v799 = vpop.permute.xlu0 %798
      %v800 = vrot.slane %v793, 4
      %v801 = vrot.slane %v795, 4
      %v802 = vrot.slane %v797, 4
      %v803 = vrot.slane %v799, 4
      %vm808 = vcmask 396552
      %809 = vst.msk [vmem:[#allocation2 + $0x8] sm:$0xf] %vm808, %v800
      %810 = vst.msk [vmem:[#allocation2 + $0x14] sm:$0xf] %vm808, %v801
      %811 = vst.msk [vmem:[#allocation2 + $0x20] sm:$0xf] %vm808, %v802
      %812 = vst.msk [vmem:[#allocation2 + $0x2c] sm:$0xf] %vm808, %v803
      %v813 = vld [vmem:[#allocation2] sm:$0xff]
      %v814 = vld [vmem:[#allocation2 + $0x8] sm:$0xf]
      %v815 = vld [vmem:[#allocation2 + $0xc] sm:$0xff]
      %v816 = vld [vmem:[#allocation2 + $0x14] sm:$0xf]
      %v817 = vld [vmem:[#allocation2 + $0x18] sm:$0xff]
      %v818 = vld [vmem:[#allocation2 + $0x20] sm:$0xf]
      %v819 = vld [vmem:[#allocation2 + $0x24] sm:$0xff]
      %v820 = vld [vmem:[#allocation2 + $0x2c] sm:$0xf]
      %821 = vst [vmem:[#allocation3] sm:$0xff] %v813
      %vm822 = vcmask 257024
      %823 = vst.msk [vmem:[#allocation3 + $0x8] sm:$0xf] %vm822, %v814
      %824 = vst [vmem:[#allocation3 + $0xc] sm:$0xff] %v815
      %825 = vst.msk [vmem:[#allocation3 + $0x14] sm:$0xf] %vm822, %v816
      %826 = vst [vmem:[#allocation3 + $0x18] sm:$0xff] %v817
      %827 = vst.msk [vmem:[#allocation3 + $0x20] sm:$0xf] %vm822, %v818
      %828 = vst [vmem:[#allocation3 + $0x24] sm:$0xff] %v819
      %829 = vst.msk [vmem:[#allocation3 + $0x2c] sm:$0xf] %vm822, %v820
      %v830 = vld [vmem:[#allocation2] sm:$0xff]
      %v831 = vld [vmem:[#allocation2 + $0x8] sm:$0xf]
      %v832 = vld [vmem:[#allocation2 + $0xc] sm:$0xff]
      %v833 = vld [vmem:[#allocation2 + $0x14] sm:$0xf]
      %v834 = vld [vmem:[#allocation2 + $0x18] sm:$0xff]
      %v835 = vld [vmem:[#allocation2 + $0x20] sm:$0xf]
      %v836 = vld [vmem:[#allocation2 + $0x24] sm:$0xff]
      %v837 = vld [vmem:[#allocation2 + $0x2c] sm:$0xf]
      %846 = vrot.lane.b32.xlu0 %v830, 127
      %v847 = vpop.permute.xlu0 %846
      %848 = vrot.lane.b32.xlu0 %v831, 127
      %v849 = vpop.permute.xlu0 %848
      %850 = vrot.lane.b32.xlu0 %v832, 127
      %v851 = vpop.permute.xlu0 %850
      %852 = vrot.lane.b32.xlu0 %v833, 127
      %v853 = vpop.permute.xlu0 %852
      %854 = vrot.lane.b32.xlu0 %v834, 127
      %v855 = vpop.permute.xlu0 %854
      %856 = vrot.lane.b32.xlu0 %v835, 127
      %v857 = vpop.permute.xlu0 %856
      %858 = vrot.lane.b32.xlu0 %v836, 127
      %v859 = vpop.permute.xlu0 %858
      %860 = vrot.lane.b32.xlu0 %v837, 127
      %v861 = vpop.permute.xlu0 %860
      %v862 = vrot.slane %v847, 4
      %v863 = vrot.slane %v849, 4
      %v864 = vrot.slane %v851, 4
      %v865 = vrot.slane %v853, 4
      %v866 = vrot.slane %v855, 4
      %v867 = vrot.slane %v857, 4
      %v868 = vrot.slane %v859, 4
      %v869 = vrot.slane %v861, 4
      %vm870 = vcmask 1043456
      %v871 = vsel %vm870, %v862, %v863
      %vm872 = vcmask 1039360
      %v873 = vsel %vm872, %v847, %v871
      %v874 = vsel %vm870, %v864, %v865
      %v875 = vsel %vm872, %v851, %v874
      %v876 = vsel %vm870, %v866, %v867
      %v877 = vsel %vm872, %v855, %v876
      %v878 = vsel %vm870, %v868, %v869
      %v879 = vsel %vm872, %v859, %v878
      %888 = vst [vmem:[#allocation3 + $0x30] sm:$0xff] %v873
      %889 = vst.msk [vmem:[#allocation3 + $0x38] sm:$0xf] %vm822, %v849
      %890 = vst [vmem:[#allocation3 + $0x3c] sm:$0xff] %v875
      %891 = vst.msk [vmem:[#allocation3 + $0x44] sm:$0xf] %vm822, %v853
      %892 = vst [vmem:[#allocation3 + $0x48] sm:$0xff] %v877
      %893 = vst.msk [vmem:[#allocation3 + $0x50] sm:$0xf] %vm822, %v857
      %894 = vst [vmem:[#allocation3 + $0x54] sm:$0xff] %v879
      %895 = vst.msk [vmem:[#allocation3 + $0x5c] sm:$0xf] %vm822, %v861
      %v896 = vld [vmem:[#allocation2] sm:$0xff]
      %v897 = vld [vmem:[#allocation2 + $0x8] sm:$0xf]
      %v898 = vld [vmem:[#allocation2 + $0xc] sm:$0xff]
      %v899 = vld [vmem:[#allocation2 + $0x14] sm:$0xf]
      %v900 = vld [vmem:[#allocation2 + $0x18] sm:$0xff]
      %v901 = vld [vmem:[#allocation2 + $0x20] sm:$0xf]
      %v902 = vld [vmem:[#allocation2 + $0x24] sm:$0xff]
      %v903 = vld [vmem:[#allocation2 + $0x2c] sm:$0xf]
      %912 = vrot.lane.b32.xlu0 %v896, 126
      %v913 = vpop.permute.xlu0 %912
      %914 = vrot.lane.b32.xlu0 %v897, 126
      %v915 = vpop.permute.xlu0 %914
      %916 = vrot.lane.b32.xlu0 %v898, 126
      %v917 = vpop.permute.xlu0 %916
      %918 = vrot.lane.b32.xlu0 %v899, 126
      %v919 = vpop.permute.xlu0 %918
      %920 = vrot.lane.b32.xlu0 %v900, 126
      %v921 = vpop.permute.xlu0 %920
      %922 = vrot.lane.b32.xlu0 %v901, 126
      %v923 = vpop.permute.xlu0 %922
      %924 = vrot.lane.b32.xlu0 %v902, 126
      %v925 = vpop.permute.xlu0 %924
      %926 = vrot.lane.b32.xlu0 %v903, 126
      %v927 = vpop.permute.xlu0 %926
      %v928 = vrot.slane %v913, 4
      %v929 = vrot.slane %v915, 4
      %v930 = vrot.slane %v917, 4
      %v931 = vrot.slane %v919, 4
      %v932 = vrot.slane %v921, 4
      %v933 = vrot.slane %v923, 4
      %v934 = vrot.slane %v925, 4
      %v935 = vrot.slane %v927, 4
      %v936 = vsel %vm870, %v928, %v929
      %vm937 = vcmask 1031168
      %v938 = vsel %vm937, %v913, %v936
      %v939 = vsel %vm870, %v930, %v931
      %v940 = vsel %vm937, %v917, %v939
      %v941 = vsel %vm870, %v932, %v933
      %v942 = vsel %vm937, %v921, %v941
      %v943 = vsel %vm870, %v934, %v935
      %v944 = vsel %vm937, %v925, %v943
      %953 = vst [vmem:[#allocation3 + $0x60] sm:$0xff] %v938
      %954 = vst.msk [vmem:[#allocation3 + $0x68] sm:$0xf] %vm822, %v915
      %955 = vst [vmem:[#allocation3 + $0x6c] sm:$0xff] %v940
      %956 = vst.msk [vmem:[#allocation3 + $0x74] sm:$0xf] %vm822, %v919
      %957 = vst [vmem:[#allocation3 + $0x78] sm:$0xff] %v942
      %958 = vst.msk [vmem:[#allocation3 + $0x80] sm:$0xf] %vm822, %v923
      %959 = vst [vmem:[#allocation3 + $0x84] sm:$0xff] %v944
      %960 = vst.msk [vmem:[#allocation3 + $0x8c] sm:$0xf] %vm822, %v927
      %v961 = vld [vmem:[#allocation2] sm:$0xff]
      %v962 = vld [vmem:[#allocation2 + $0x8] sm:$0xf]
      %v963 = vld [vmem:[#allocation2 + $0xc] sm:$0xff]
      %v964 = vld [vmem:[#allocation2 + $0x14] sm:$0xf]
      %v965 = vld [vmem:[#allocation2 + $0x18] sm:$0xff]
      %v966 = vld [vmem:[#allocation2 + $0x20] sm:$0xf]
      %v967 = vld [vmem:[#allocation2 + $0x24] sm:$0xff]
      %v968 = vld [vmem:[#allocation2 + $0x2c] sm:$0xf]
      %977 = vrot.lane.b32.xlu0 %v961, 110
      %v978 = vpop.permute.xlu0 %977
      %979 = vrot.lane.b32.xlu0 %v962, 110
      %v980 = vpop.permute.xlu0 %979
      %981 = vrot.lane.b32.xlu0 %v963, 110
      %v982 = vpop.permute.xlu0 %981
      %983 = vrot.lane.b32.xlu0 %v964, 110
      %v984 = vpop.permute.xlu0 %983
      %985 = vrot.lane.b32.xlu0 %v965, 110
      %v986 = vpop.permute.xlu0 %985
      %987 = vrot.lane.b32.xlu0 %v966, 110
      %v988 = vpop.permute.xlu0 %987
      %989 = vrot.lane.b32.xlu0 %v967, 110
      %v990 = vpop.permute.xlu0 %989
      %991 = vrot.lane.b32.xlu0 %v968, 110
      %v992 = vpop.permute.xlu0 %991
      %v993 = vrot.slane %v978, 4
      %v994 = vrot.slane %v980, 4
      %v995 = vrot.slane %v982, 4
      %v996 = vrot.slane %v984, 4
      %v997 = vrot.slane %v986, 4
      %v998 = vrot.slane %v988, 4
      %v999 = vrot.slane %v990, 4
      %v1000 = vrot.slane %v992, 4
      %v1001 = vsel %vm870, %v993, %v994
      %vm1002 = vcmask 900096
      %v1003 = vsel %vm1002, %v978, %v1001
      %v1004 = vsel %vm870, %v995, %v996
      %v1005 = vsel %vm1002, %v982, %v1004
      %v1006 = vsel %vm870, %v997, %v998
      %v1007 = vsel %vm1002, %v986, %v1006
      %v1008 = vsel %vm870, %v999, %v1000
      %v1009 = vsel %vm1002, %v990, %v1008
      %1018 = vst [vmem:[#allocation3 + $0x90] sm:$0xff] %v1003
      %1019 = vst.msk [vmem:[#allocation3 + $0x98] sm:$0xf] %vm822, %v980
      %1020 = vst [vmem:[#allocation3 + $0x9c] sm:$0xff] %v1005
      %1021 = vst.msk [vmem:[#allocation3 + $0xa4] sm:$0xf] %vm822, %v984
      %1022 = vst [vmem:[#allocation3 + $0xa8] sm:$0xff] %v1007
      %1023 = vst.msk [vmem:[#allocation3 + $0xb0] sm:$0xf] %vm822, %v988
      %1024 = vst [vmem:[#allocation3 + $0xb4] sm:$0xff] %v1009
      %1025 = vst.msk [vmem:[#allocation3 + $0xbc] sm:$0xf] %vm822, %v992
      %v1026 = vld [vmem:[#allocation2] sm:$0xff]
      %v1027 = vld [vmem:[#allocation2 + $0x8] sm:$0xf]
      %v1028 = vld [vmem:[#allocation2 + $0xc] sm:$0xff]
      %v1029 = vld [vmem:[#allocation2 + $0x14] sm:$0xf]
      %v1030 = vld [vmem:[#allocation2 + $0x18] sm:$0xff]
      %v1031 = vld [vmem:[#allocation2 + $0x20] sm:$0xf]
      %v1032 = vld [vmem:[#allocation2 + $0x24] sm:$0xff]
      %v1033 = vld [vmem:[#allocation2 + $0x2c] sm:$0xf]
      %1042 = vrot.lane.b32.xlu0 %v1026, 109
      %v1043 = vpop.permute.xlu0 %1042
      %1044 = vrot.lane.b32.xlu0 %v1027, 109
      %v1045 = vpop.permute.xlu0 %1044
      %1046 = vrot.lane.b32.xlu0 %v1028, 109
      %v1047 = vpop.permute.xlu0 %1046
      %1048 = vrot.lane.b32.xlu0 %v1029, 109
      %v1049 = vpop.permute.xlu0 %1048
      %1050 = vrot.lane.b32.xlu0 %v1030, 109
      %v1051 = vpop.permute.xlu0 %1050
      %1052 = vrot.lane.b32.xlu0 %v1031, 109
      %v1053 = vpop.permute.xlu0 %1052
      %1054 = vrot.lane.b32.xlu0 %v1032, 109
      %v1055 = vpop.permute.xlu0 %1054
      %1056 = vrot.lane.b32.xlu0 %v1033, 109
      %v1057 = vpop.permute.xlu0 %1056
      %v1058 = vrot.slane %v1043, 4
      %v1059 = vrot.slane %v1045, 4
      %v1060 = vrot.slane %v1047, 4
      %v1061 = vrot.slane %v1049, 4
      %v1062 = vrot.slane %v1051, 4
      %v1063 = vrot.slane %v1053, 4
      %v1064 = vrot.slane %v1055, 4
      %v1065 = vrot.slane %v1057, 4
      %v1066 = vsel %vm870, %v1058, %v1059
      %vm1067 = vcmask 891904
      %v1068 = vsel %vm1067, %v1043, %v1066
      %v1069 = vsel %vm870, %v1060, %v1061
      %v1070 = vsel %vm1067, %v1047, %v1069
      %v1071 = vsel %vm870, %v1062, %v1063
      %v1072 = vsel %vm1067, %v1051, %v1071
      %v1073 = vsel %vm870, %v1064, %v1065
      %v1074 = vsel %vm1067, %v1055, %v1073
      %1083 = vst [vmem:[#allocation3 + $0xc0] sm:$0xff] %v1068
      %1084 = vst.msk [vmem:[#allocation3 + $0xc8] sm:$0xf] %vm822, %v1045
      %1085 = vst [vmem:[#allocation3 + $0xcc] sm:$0xff] %v1070
      %1086 = vst.msk [vmem:[#allocation3 + $0xd4] sm:$0xf] %vm822, %v1049
      %1087 = vst [vmem:[#allocation3 + $0xd8] sm:$0xff] %v1072
      %1088 = vst.msk [vmem:[#allocation3 + $0xe0] sm:$0xf] %vm822, %v1053
      %1089 = vst [vmem:[#allocation3 + $0xe4] sm:$0xff] %v1074
      %1090 = vst.msk [vmem:[#allocation3 + $0xec] sm:$0xf] %vm822, %v1057
      %v1091 = vld [vmem:[#allocation2] sm:$0xff]
      %v1092 = vld [vmem:[#allocation2 + $0x8] sm:$0xf]
      %v1093 = vld [vmem:[#allocation2 + $0xc] sm:$0xff]
      %v1094 = vld [vmem:[#allocation2 + $0x14] sm:$0xf]
      %v1095 = vld [vmem:[#allocation2 + $0x18] sm:$0xff]
      %v1096 = vld [vmem:[#allocation2 + $0x20] sm:$0xf]
      %v1097 = vld [vmem:[#allocation2 + $0x24] sm:$0xff]
      %v1098 = vld [vmem:[#allocation2 + $0x2c] sm:$0xf]
      %1107 = vrot.lane.b32.xlu0 %v1091, 108
      %v1108 = vpop.permute.xlu0 %1107
      %1109 = vrot.lane.b32.xlu0 %v1092, 108
      %v1110 = vpop.permute.xlu0 %1109
      %1111 = vrot.lane.b32.xlu0 %v1093, 108
      %v1112 = vpop.permute.xlu0 %1111
      %1113 = vrot.lane.b32.xlu0 %v1094, 108
      %v1114 = vpop.permute.xlu0 %1113
      %1115 = vrot.lane.b32.xlu0 %v1095, 108
      %v1116 = vpop.permute.xlu0 %1115
      %1117 = vrot.lane.b32.xlu0 %v1096, 108
      %v1118 = vpop.permute.xlu0 %1117
      %1119 = vrot.lane.b32.xlu0 %v1097, 108
      %v1120 = vpop.permute.xlu0 %1119
      %1121 = vrot.lane.b32.xlu0 %v1098, 108
      %v1122 = vpop.permute.xlu0 %1121
      %v1123 = vrot.slane %v1108, 4
      %v1124 = vrot.slane %v1110, 4
      %v1125 = vrot.slane %v1112, 4
      %v1126 = vrot.slane %v1114, 4
      %v1127 = vrot.slane %v1116, 4
      %v1128 = vrot.slane %v1118, 4
      %v1129 = vrot.slane %v1120, 4
      %v1130 = vrot.slane %v1122, 4
      %v1131 = vsel %vm870, %v1123, %v1124
      %vm1132 = vcmask 883712
      %v1133 = vsel %vm1132, %v1108, %v1131
      %v1134 = vsel %vm870, %v1125, %v1126
      %v1135 = vsel %vm1132, %v1112, %v1134
      %v1136 = vsel %vm870, %v1127, %v1128
      %v1137 = vsel %vm1132, %v1116, %v1136
      %v1138 = vsel %vm870, %v1129, %v1130
      %v1139 = vsel %vm1132, %v1120, %v1138
      %1148 = vst [vmem:[#allocation3 + $0xf0] sm:$0xff] %v1133
      %1149 = vst.msk [vmem:[#allocation3 + $0xf8] sm:$0xf] %vm822, %v1110
      %1150 = vst [vmem:[#allocation3 + $0xfc] sm:$0xff] %v1135
      %1151 = vst.msk [vmem:[#allocation3 + $0x104] sm:$0xf] %vm822, %v1114
      %1152 = vst [vmem:[#allocation3 + $0x108] sm:$0xff] %v1137
      %1153 = vst.msk [vmem:[#allocation3 + $0x110] sm:$0xf] %vm822, %v1118
      %1154 = vst [vmem:[#allocation3 + $0x114] sm:$0xff] %v1139
      %1155 = vst.msk [vmem:[#allocation3 + $0x11c] sm:$0xf] %vm822, %v1122
      %v1156 = vld [vmem:[#allocation2] sm:$0xff]
      %v1157 = vld [vmem:[#allocation2 + $0x8] sm:$0xf]
      %v1158 = vld [vmem:[#allocation2 + $0xc] sm:$0xff]
      %v1159 = vld [vmem:[#allocation2 + $0x14] sm:$0xf]
      %v1160 = vld [vmem:[#allocation2 + $0x18] sm:$0xff]
      %v1161 = vld [vmem:[#allocation2 + $0x20] sm:$0xf]
      %v1162 = vld [vmem:[#allocation2 + $0x24] sm:$0xff]
      %v1163 = vld [vmem:[#allocation2 + $0x2c] sm:$0xf]
      %1172 = vrot.lane.b32.xlu0 %v1156, 92
      %v1173 = vpop.permute.xlu0 %1172
      %1174 = vrot.lane.b32.xlu0 %v1157, 92
      %v1175 = vpop.permute.xlu0 %1174
      %1176 = vrot.lane.b32.xlu0 %v1158, 92
      %v1177 = vpop.permute.xlu0 %1176
      %1178 = vrot.lane.b32.xlu0 %v1159, 92
      %v1179 = vpop.permute.xlu0 %1178
      %1180 = vrot.lane.b32.xlu0 %v1160, 92
      %v1181 = vpop.permute.xlu0 %1180
      %1182 = vrot.lane.b32.xlu0 %v1161, 92
      %v1183 = vpop.permute.xlu0 %1182
      %1184 = vrot.lane.b32.xlu0 %v1162, 92
      %v1185 = vpop.permute.xlu0 %1184
      %1186 = vrot.lane.b32.xlu0 %v1163, 92
      %v1187 = vpop.permute.xlu0 %1186
      %v1188 = vrot.slane %v1173, 4
      %v1189 = vrot.slane %v1175, 4
      %v1190 = vrot.slane %v1177, 4
      %v1191 = vrot.slane %v1179, 4
      %v1192 = vrot.slane %v1181, 4
      %v1193 = vrot.slane %v1183, 4
      %v1194 = vrot.slane %v1185, 4
      %v1195 = vrot.slane %v1187, 4
      %v1196 = vsel %vm870, %v1188, %v1189
      %vm1197 = vcmask 752640
      %v1198 = vsel %vm1197, %v1173, %v1196
      %v1199 = vsel %vm870, %v1190, %v1191
      %v1200 = vsel %vm1197, %v1177, %v1199
      %v1201 = vsel %vm870, %v1192, %v1193
      %v1202 = vsel %vm1197, %v1181, %v1201
      %v1203 = vsel %vm870, %v1194, %v1195
      %v1204 = vsel %vm1197, %v1185, %v1203
      %1213 = vst [vmem:[#allocation3 + $0x120] sm:$0xff] %v1198
      %1214 = vst.msk [vmem:[#allocation3 + $0x128] sm:$0xf] %vm822, %v1175
      %1215 = vst [vmem:[#allocation3 + $0x12c] sm:$0xff] %v1200
      %1216 = vst.msk [vmem:[#allocation3 + $0x134] sm:$0xf] %vm822, %v1179
      %1217 = vst [vmem:[#allocation3 + $0x138] sm:$0xff] %v1202
      %1218 = vst.msk [vmem:[#allocation3 + $0x140] sm:$0xf] %vm822, %v1183
      %1219 = vst [vmem:[#allocation3 + $0x144] sm:$0xff] %v1204
      %1220 = vst.msk [vmem:[#allocation3 + $0x14c] sm:$0xf] %vm822, %v1187
      %v1221 = vld [vmem:[#allocation2] sm:$0xff]
      %v1222 = vld [vmem:[#allocation2 + $0x8] sm:$0xf]
      %v1223 = vld [vmem:[#allocation2 + $0xc] sm:$0xff]
      %v1224 = vld [vmem:[#allocation2 + $0x14] sm:$0xf]
      %v1225 = vld [vmem:[#allocation2 + $0x18] sm:$0xff]
      %v1226 = vld [vmem:[#allocation2 + $0x20] sm:$0xf]
      %v1227 = vld [vmem:[#allocation2 + $0x24] sm:$0xff]
      %v1228 = vld [vmem:[#allocation2 + $0x2c] sm:$0xf]
      %1237 = vrot.lane.b32.xlu0 %v1221, 91
      %v1238 = vpop.permute.xlu0 %1237
      %1239 = vrot.lane.b32.xlu0 %v1222, 91
      %v1240 = vpop.permute.xlu0 %1239
      %1241 = vrot.lane.b32.xlu0 %v1223, 91
      %v1242 = vpop.permute.xlu0 %1241
      %1243 = vrot.lane.b32.xlu0 %v1224, 91
      %v1244 = vpop.permute.xlu0 %1243
      %1245 = vrot.lane.b32.xlu0 %v1225, 91
      %v1246 = vpop.permute.xlu0 %1245
      %1247 = vrot.lane.b32.xlu0 %v1226, 91
      %v1248 = vpop.permute.xlu0 %1247
      %1249 = vrot.lane.b32.xlu0 %v1227, 91
      %v1250 = vpop.permute.xlu0 %1249
      %1251 = vrot.lane.b32.xlu0 %v1228, 91
      %v1252 = vpop.permute.xlu0 %1251
      %v1253 = vrot.slane %v1238, 4
      %v1254 = vrot.slane %v1240, 4
      %v1255 = vrot.slane %v1242, 4
      %v1256 = vrot.slane %v1244, 4
      %v1257 = vrot.slane %v1246, 4
      %v1258 = vrot.slane %v1248, 4
      %v1259 = vrot.slane %v1250, 4
      %v1260 = vrot.slane %v1252, 4
      %v1261 = vsel %vm870, %v1253, %v1254
      %vm1262 = vcmask 744448
      %v1263 = vsel %vm1262, %v1238, %v1261
      %v1264 = vsel %vm870, %v1255, %v1256
      %v1265 = vsel %vm1262, %v1242, %v1264
      %v1266 = vsel %vm870, %v1257, %v1258
      %v1267 = vsel %vm1262, %v1246, %v1266
      %v1268 = vsel %vm870, %v1259, %v1260
      %v1269 = vsel %vm1262, %v1250, %v1268
      %1278 = vst [vmem:[#allocation3 + $0x150] sm:$0xff] %v1263
      %1279 = vst.msk [vmem:[#allocation3 + $0x158] sm:$0xf] %vm822, %v1240
      %1280 = vst [vmem:[#allocation3 + $0x15c] sm:$0xff] %v1265
      %1281 = vst.msk [vmem:[#allocation3 + $0x164] sm:$0xf] %vm822, %v1244
      %1282 = vst [vmem:[#allocation3 + $0x168] sm:$0xff] %v1267
      %1283 = vst.msk [vmem:[#allocation3 + $0x170] sm:$0xf] %vm822, %v1248
      %1284 = vst [vmem:[#allocation3 + $0x174] sm:$0xff] %v1269
      %1285 = vst.msk [vmem:[#allocation3 + $0x17c] sm:$0xf] %vm822, %v1252
      %v1286 = vld [vmem:[#allocation2] sm:$0xff]
      %v1287 = vld [vmem:[#allocation2 + $0x8] sm:$0xf]
      %v1288 = vld [vmem:[#allocation2 + $0xc] sm:$0xff]
      %v1289 = vld [vmem:[#allocation2 + $0x14] sm:$0xf]
      %v1290 = vld [vmem:[#allocation2 + $0x18] sm:$0xff]
      %v1291 = vld [vmem:[#allocation2 + $0x20] sm:$0xf]
      %v1292 = vld [vmem:[#allocation2 + $0x24] sm:$0xff]
      %v1293 = vld [vmem:[#allocation2 + $0x2c] sm:$0xf]
      %1302 = vrot.lane.b32.xlu0 %v1286, 90
      %v1303 = vpop.permute.xlu0 %1302
      %1304 = vrot.lane.b32.xlu0 %v1287, 90
      %v1305 = vpop.permute.xlu0 %1304
      %1306 = vrot.lane.b32.xlu0 %v1288, 90
      %v1307 = vpop.permute.xlu0 %1306
      %1308 = vrot.lane.b32.xlu0 %v1289, 90
      %v1309 = vpop.permute.xlu0 %1308
      %1310 = vrot.lane.b32.xlu0 %v1290, 90
      %v1311 = vpop.permute.xlu0 %1310
      %1312 = vrot.lane.b32.xlu0 %v1291, 90
      %v1313 = vpop.permute.xlu0 %1312
      %1314 = vrot.lane.b32.xlu0 %v1292, 90
      %v1315 = vpop.permute.xlu0 %1314
      %1316 = vrot.lane.b32.xlu0 %v1293, 90
      %v1317 = vpop.permute.xlu0 %1316
      %v1318 = vrot.slane %v1303, 4
      %v1319 = vrot.slane %v1305, 4
      %v1320 = vrot.slane %v1307, 4
      %v1321 = vrot.slane %v1309, 4
      %v1322 = vrot.slane %v1311, 4
      %v1323 = vrot.slane %v1313, 4
      %v1324 = vrot.slane %v1315, 4
      %v1325 = vrot.slane %v1317, 4
      %v1326 = vsel %vm870, %v1318, %v1319
      %vm1327 = vcmask 736256
      %v1328 = vsel %vm1327, %v1303, %v1326
      %v1329 = vsel %vm870, %v1320, %v1321
      %v1330 = vsel %vm1327, %v1307, %v1329
      %v1331 = vsel %vm870, %v1322, %v1323
      %v1332 = vsel %vm1327, %v1311, %v1331
      %v1333 = vsel %vm870, %v1324, %v1325
      %v1334 = vsel %vm1327, %v1315, %v1333
      %1343 = vst [vmem:[#allocation3 + $0x180] sm:$0xff] %v1328
      %1344 = vst.msk [vmem:[#allocation3 + $0x188] sm:$0xf] %vm822, %v1305
      %1345 = vst [vmem:[#allocation3 + $0x18c] sm:$0xff] %v1330
      %1346 = vst.msk [vmem:[#allocation3 + $0x194] sm:$0xf] %vm822, %v1309
      %1347 = vst [vmem:[#allocation3 + $0x198] sm:$0xff] %v1332
      %1348 = vst.msk [vmem:[#allocation3 + $0x1a0] sm:$0xf] %vm822, %v1313
      %1349 = vst [vmem:[#allocation3 + $0x1a4] sm:$0xff] %v1334
      %1350 = vst.msk [vmem:[#allocation3 + $0x1ac] sm:$0xf] %vm822, %v1317
      %v1351 = vld [vmem:[%s6] sm:$0xff]
      %v1352 = vld [vmem:[%s6 + $0x8] sm:$0xf]
      %v1353 = vld [vmem:[#allocation3] sm:$0xff]
      %v1354 = vld [vmem:[#allocation3 + $0x8] sm:$0xf]
      %v1355 = vld [vmem:[#allocation3 + $0xc] sm:$0xff]
      %v1356 = vld [vmem:[#allocation3 + $0x14] sm:$0xf]
      %v1357 = vld [vmem:[#allocation3 + $0x18] sm:$0xff]
      %v1358 = vld [vmem:[#allocation3 + $0x20] sm:$0xf]
      %v1359 = vld [vmem:[#allocation3 + $0x24] sm:$0xff]
      %v1360 = vld [vmem:[#allocation3 + $0x2c] sm:$0xf]
      %v1361 = vld [vmem:[#allocation3 + $0x30] sm:$0xff]
      %v1362 = vld [vmem:[#allocation3 + $0x38] sm:$0xf]
      %v1363 = vld [vmem:[#allocation3 + $0x3c] sm:$0xff]
      %v1364 = vld [vmem:[#allocation3 + $0x44] sm:$0xf]
      %v1365 = vld [vmem:[#allocation3 + $0x48] sm:$0xff]
      %v1366 = vld [vmem:[#allocation3 + $0x50] sm:$0xf]
      %v1367 = vld [vmem:[#allocation3 + $0x54] sm:$0xff]
      %v1368 = vld [vmem:[#allocation3 + $0x5c] sm:$0xf]
      %v1369 = vld [vmem:[#allocation3 + $0x60] sm:$0xff]
      %v1370 = vld [vmem:[#allocation3 + $0x68] sm:$0xf]
      %v1371 = vld [vmem:[#allocation3 + $0x6c] sm:$0xff]
      %v1372 = vld [vmem:[#allocation3 + $0x74] sm:$0xf]
      %v1373 = vld [vmem:[#allocation3 + $0x78] sm:$0xff]
      %v1374 = vld [vmem:[#allocation3 + $0x80] sm:$0xf]
      %v1375 = vld [vmem:[#allocation3 + $0x84] sm:$0xff]
      %v1376 = vld [vmem:[#allocation3 + $0x8c] sm:$0xf]
      %v1377 = vld [vmem:[#allocation3 + $0x90] sm:$0xff]
      %v1378 = vld [vmem:[#allocation3 + $0x98] sm:$0xf]
      %v1379 = vld [vmem:[#allocation3 + $0x9c] sm:$0xff]
      %v1380 = vld [vmem:[#allocation3 + $0xa4] sm:$0xf]
      %v1381 = vld [vmem:[#allocation3 + $0xa8] sm:$0xff]
      %v1382 = vld [vmem:[#allocation3 + $0xb0] sm:$0xf]
      %v1383 = vld [vmem:[#allocation3 + $0xb4] sm:$0xff]
      %v1384 = vld [vmem:[#allocation3 + $0xbc] sm:$0xf]
      %v1385 = vld [vmem:[#allocation3 + $0xc0] sm:$0xff]
      %v1386 = vld [vmem:[#allocation3 + $0xc8] sm:$0xf]
      %v1387 = vld [vmem:[#allocation3 + $0xcc] sm:$0xff]
      %v1388 = vld [vmem:[#allocation3 + $0xd4] sm:$0xf]
      %v1389 = vld [vmem:[#allocation3 + $0xd8] sm:$0xff]
      %v1390 = vld [vmem:[#allocation3 + $0xe0] sm:$0xf]
      %v1391 = vld [vmem:[#allocation3 + $0xe4] sm:$0xff]
      %v1392 = vld [vmem:[#allocation3 + $0xec] sm:$0xf]
      %v1393 = vld [vmem:[#allocation3 + $0xf0] sm:$0xff]
      %v1394 = vld [vmem:[#allocation3 + $0xf8] sm:$0xf]
      %v1395 = vld [vmem:[#allocation3 + $0xfc] sm:$0xff]
      %v1396 = vld [vmem:[#allocation3 + $0x104] sm:$0xf]
      %v1397 = vld [vmem:[#allocation3 + $0x108] sm:$0xff]
      %v1398 = vld [vmem:[#allocation3 + $0x110] sm:$0xf]
      %v1399 = vld [vmem:[#allocation3 + $0x114] sm:$0xff]
      %v1400 = vld [vmem:[#allocation3 + $0x11c] sm:$0xf]
      %v1401 = vld [vmem:[#allocation3 + $0x120] sm:$0xff]
      %v1402 = vld [vmem:[#allocation3 + $0x128] sm:$0xf]
      %v1403 = vld [vmem:[#allocation3 + $0x12c] sm:$0xff]
      %v1404 = vld [vmem:[#allocation3 + $0x134] sm:$0xf]
      %v1405 = vld [vmem:[#allocation3 + $0x138] sm:$0xff]
      %v1406 = vld [vmem:[#allocation3 + $0x140] sm:$0xf]
      %v1407 = vld [vmem:[#allocation3 + $0x144] sm:$0xff]
      %v1408 = vld [vmem:[#allocation3 + $0x14c] sm:$0xf]
      %v1409 = vld [vmem:[#allocation3 + $0x150] sm:$0xff]
      %v1410 = vld [vmem:[#allocation3 + $0x158] sm:$0xf]
      %v1411 = vld [vmem:[#allocation3 + $0x15c] sm:$0xff]
      %v1412 = vld [vmem:[#allocation3 + $0x164] sm:$0xf]
      %v1413 = vld [vmem:[#allocation3 + $0x168] sm:$0xff]
      %v1414 = vld [vmem:[#allocation3 + $0x170] sm:$0xf]
      %v1415 = vld [vmem:[#allocation3 + $0x174] sm:$0xff]
      %v1416 = vld [vmem:[#allocation3 + $0x17c] sm:$0xf]
      %v1417 = vld [vmem:[#allocation3 + $0x180] sm:$0xff]
      %v1418 = vld [vmem:[#allocation3 + $0x188] sm:$0xf]
      %v1419 = vld [vmem:[#allocation3 + $0x18c] sm:$0xff]
      %v1420 = vld [vmem:[#allocation3 + $0x194] sm:$0xf]
      %v1421 = vld [vmem:[#allocation3 + $0x198] sm:$0xff]
      %v1422 = vld [vmem:[#allocation3 + $0x1a0] sm:$0xf]
      %v1423 = vld [vmem:[#allocation3 + $0x1a4] sm:$0xff]
      %v1424 = vld [vmem:[#allocation3 + $0x1ac] sm:$0xf]
      %v1427 = vunpack.c.l.b16 %v1351
      %v1428 = vunpack.c.h.b16 %v1351
      %v1429 = vunpack.c.l.b16 %v1352
      %v1430 = vpack.c.b16 %v1427, %v1427
      %v1431 = vpack.c.b16 %v1428, %v1428
      %v1432 = vpack.c.b16 %v1429, %v1429
      %v1507 = vunpack.c.l.b16 %v1353
      %v1508 = vunpack.c.h.b16 %v1353
      %v1509 = vunpack.c.l.b16 %v1354
      %v1510 = vunpack.c.l.b16 %v1355
      %v1511 = vunpack.c.h.b16 %v1355
      %v1512 = vunpack.c.l.b16 %v1356
      %v1513 = vunpack.c.l.b16 %v1357
      %v1514 = vunpack.c.h.b16 %v1357
      %v1515 = vunpack.c.l.b16 %v1358
      %v1516 = vunpack.c.l.b16 %v1359
      %v1517 = vunpack.c.h.b16 %v1359
      %v1518 = vunpack.c.l.b16 %v1360
      %v1519 = vunpack.c.l.b16 %v1361
      %v1520 = vunpack.c.h.b16 %v1361
      %v1521 = vunpack.c.l.b16 %v1362
      %v1522 = vunpack.c.l.b16 %v1363
      %v1523 = vunpack.c.h.b16 %v1363
      %v1524 = vunpack.c.l.b16 %v1364
      %v1525 = vunpack.c.l.b16 %v1365
      %v1526 = vunpack.c.h.b16 %v1365
      %v1527 = vunpack.c.l.b16 %v1366
      %v1528 = vunpack.c.l.b16 %v1367
      %v1529 = vunpack.c.h.b16 %v1367
      %v1530 = vunpack.c.l.b16 %v1368
      %v1531 = vunpack.c.l.b16 %v1369
      %v1532 = vunpack.c.h.b16 %v1369
      %v1533 = vunpack.c.l.b16 %v1370
      %v1534 = vunpack.c.l.b16 %v1371
      %v1535 = vunpack.c.h.b16 %v1371
      %v1536 = vunpack.c.l.b16 %v1372
      %v1537 = vunpack.c.l.b16 %v1373
      %v1538 = vunpack.c.h.b16 %v1373
      %v1539 = vunpack.c.l.b16 %v1374
      %v1540 = vunpack.c.l.b16 %v1375
      %v1541 = vunpack.c.h.b16 %v1375
      %v1542 = vunpack.c.l.b16 %v1376
      %v1543 = vunpack.c.l.b16 %v1377
      %v1544 = vunpack.c.h.b16 %v1377
      %v1545 = vunpack.c.l.b16 %v1378
      %v1546 = vunpack.c.l.b16 %v1379
      %v1547 = vunpack.c.h.b16 %v1379
      %v1548 = vunpack.c.l.b16 %v1380
      %v1549 = vunpack.c.l.b16 %v1381
      %v1550 = vunpack.c.h.b16 %v1381
      %v1551 = vunpack.c.l.b16 %v1382
      %v1552 = vunpack.c.l.b16 %v1383
      %v1553 = vunpack.c.h.b16 %v1383
      %v1554 = vunpack.c.l.b16 %v1384
      %v1555 = vunpack.c.l.b16 %v1385
      %v1556 = vunpack.c.h.b16 %v1385
      %v1557 = vunpack.c.l.b16 %v1386
      %v1558 = vunpack.c.l.b16 %v1387
      %v1559 = vunpack.c.h.b16 %v1387
      %v1560 = vunpack.c.l.b16 %v1388
      %v1561 = vunpack.c.l.b16 %v1389
      %v1562 = vunpack.c.h.b16 %v1389
      %v1563 = vunpack.c.l.b16 %v1390
      %v1564 = vunpack.c.l.b16 %v1391
      %v1565 = vunpack.c.h.b16 %v1391
      %v1566 = vunpack.c.l.b16 %v1392
      %v1567 = vunpack.c.l.b16 %v1393
      %v1568 = vunpack.c.h.b16 %v1393
      %v1569 = vunpack.c.l.b16 %v1394
      %v1570 = vunpack.c.l.b16 %v1395
      %v1571 = vunpack.c.h.b16 %v1395
      %v1572 = vunpack.c.l.b16 %v1396
      %v1573 = vunpack.c.l.b16 %v1397
      %v1574 = vunpack.c.h.b16 %v1397
      %v1575 = vunpack.c.l.b16 %v1398
      %v1576 = vunpack.c.l.b16 %v1399
      %v1577 = vunpack.c.h.b16 %v1399
      %v1578 = vunpack.c.l.b16 %v1400
      %v1579 = vunpack.c.l.b16 %v1401
      %v1580 = vunpack.c.h.b16 %v1401
      %v1581 = vunpack.c.l.b16 %v1402
      %v1582 = vunpack.c.l.b16 %v1403
      %v1583 = vunpack.c.h.b16 %v1403
      %v1584 = vunpack.c.l.b16 %v1404
      %v1585 = vunpack.c.l.b16 %v1405
      %v1586 = vunpack.c.h.b16 %v1405
      %v1587 = vunpack.c.l.b16 %v1406
      %v1588 = vunpack.c.l.b16 %v1407
      %v1589 = vunpack.c.h.b16 %v1407
      %v1590 = vunpack.c.l.b16 %v1408
      %v1591 = vunpack.c.l.b16 %v1409
      %v1592 = vunpack.c.h.b16 %v1409
      %v1593 = vunpack.c.l.b16 %v1410
      %v1594 = vunpack.c.l.b16 %v1411
      %v1595 = vunpack.c.h.b16 %v1411
      %v1596 = vunpack.c.l.b16 %v1412
      %v1597 = vunpack.c.l.b16 %v1413
      %v1598 = vunpack.c.h.b16 %v1413
      %v1599 = vunpack.c.l.b16 %v1414
      %v1600 = vunpack.c.l.b16 %v1415
      %v1601 = vunpack.c.h.b16 %v1415
      %v1602 = vunpack.c.l.b16 %v1416
      %v1603 = vunpack.c.l.b16 %v1417
      %v1604 = vunpack.c.h.b16 %v1417
      %v1605 = vunpack.c.l.b16 %v1418
      %v1606 = vunpack.c.l.b16 %v1419
      %v1607 = vunpack.c.h.b16 %v1419
      %v1608 = vunpack.c.l.b16 %v1420
      %v1609 = vunpack.c.l.b16 %v1421
      %v1610 = vunpack.c.h.b16 %v1421
      %v1611 = vunpack.c.l.b16 %v1422
      %v1612 = vunpack.c.l.b16 %v1423
      %v1613 = vunpack.c.h.b16 %v1423
      %v1614 = vunpack.c.l.b16 %v1424
      %v1615 = vpack.c.b16 %v1510, %v1507
      %v1616 = vpack.c.b16 %v1511, %v1508
      %v1617 = vpack.c.b16 %v1512, %v1509
      %v1618 = vpack.c.b16 %v1516, %v1513
      %v1619 = vpack.c.b16 %v1517, %v1514
      %v1620 = vpack.c.b16 %v1518, %v1515
      %v1621 = vpack.c.b16 %v1522, %v1519
      %v1622 = vpack.c.b16 %v1523, %v1520
      %v1623 = vpack.c.b16 %v1524, %v1521
      %v1624 = vpack.c.b16 %v1528, %v1525
      %v1625 = vpack.c.b16 %v1529, %v1526
      %v1626 = vpack.c.b16 %v1530, %v1527
      %v1627 = vpack.c.b16 %v1534, %v1531
      %v1628 = vpack.c.b16 %v1535, %v1532
      %v1629 = vpack.c.b16 %v1536, %v1533
      %v1630 = vpack.c.b16 %v1540, %v1537
      %v1631 = vpack.c.b16 %v1541, %v1538
      %v1632 = vpack.c.b16 %v1542, %v1539
      %v1633 = vpack.c.b16 %v1546, %v1543
      %v1634 = vpack.c.b16 %v1547, %v1544
      %v1635 = vpack.c.b16 %v1548, %v1545
      %v1636 = vpack.c.b16 %v1552, %v1549
      %v1637 = vpack.c.b16 %v1553, %v1550
      %v1638 = vpack.c.b16 %v1554, %v1551
      %v1639 = vpack.c.b16 %v1558, %v1555
      %v1640 = vpack.c.b16 %v1559, %v1556
      %v1641 = vpack.c.b16 %v1560, %v1557
      %v1642 = vpack.c.b16 %v1564, %v1561
      %v1643 = vpack.c.b16 %v1565, %v1562
      %v1644 = vpack.c.b16 %v1566, %v1563
      %v1645 = vpack.c.b16 %v1570, %v1567
      %v1646 = vpack.c.b16 %v1571, %v1568
      %v1647 = vpack.c.b16 %v1572, %v1569
      %v1648 = vpack.c.b16 %v1576, %v1573
      %v1649 = vpack.c.b16 %v1577, %v1574
      %v1650 = vpack.c.b16 %v1578, %v1575
      %v1651 = vpack.c.b16 %v1582, %v1579
      %v1652 = vpack.c.b16 %v1583, %v1580
      %v1653 = vpack.c.b16 %v1584, %v1581
      %v1654 = vpack.c.b16 %v1588, %v1585
      %v1655 = vpack.c.b16 %v1589, %v1586
      %v1656 = vpack.c.b16 %v1590, %v1587
      %v1657 = vpack.c.b16 %v1594, %v1591
      %v1658 = vpack.c.b16 %v1595, %v1592
      %v1659 = vpack.c.b16 %v1596, %v1593
      %v1660 = vpack.c.b16 %v1600, %v1597
      %v1661 = vpack.c.b16 %v1601, %v1598
      %v1662 = vpack.c.b16 %v1602, %v1599
      %v1663 = vpack.c.b16 %v1606, %v1603
      %v1664 = vpack.c.b16 %v1607, %v1604
      %v1665 = vpack.c.b16 %v1608, %v1605
      %v1666 = vpack.c.b16 %v1612, %v1609
      %v1667 = vpack.c.b16 %v1613, %v1610
      %v1668 = vpack.c.b16 %v1614, %v1611
      %vm1723 = vcmask 261120
      %v1725 = vsel %vm1723, %v1432, 0
      %1727 = vmatpush.bf16.msra.mxu0 %v1636
      %1728 = vmatpush.bf16.msra.mxu0 %v1633
      %1729 = vmatpush.bf16.msra.mxu0 %v1630
      %1730 = vmatpush.bf16.msra.mxu0 %v1627
      %1731 = vmatpush.bf16.msra.mxu0 %v1624
      %1732 = vmatpush.bf16.msra.mxu0 %v1621
      %1733 = vmatpush.bf16.msra.mxu0 %v1618
      %1734 = vmatpush.bf16.msra.mxu0 %v1615
      %1735 = vmatmul.bf16.gmra.mxu0 %v1430
      %v1736 = vpop.f32.mrf.mxu0
      %v1737 = vadd.f32 0.0, %v1736
      %v1738 = vpop.f32.mrf.mxu0
      %1739 = vdwg.mxu0
      %1740 = vmatpush.bf16.msra.mxu0 %v1660
      %1741 = vmatpush.bf16.msra.mxu0 %v1657
      %1742 = vmatpush.bf16.msra.mxu0 %v1654
      %1743 = vmatpush.bf16.msra.mxu0 %v1651
      %1744 = vmatpush.bf16.msra.mxu0 %v1648
      %1745 = vmatpush.bf16.msra.mxu0 %v1645
      %1746 = vmatpush.bf16.msra.mxu0 %v1642
      %1747 = vmatpush.bf16.msra.mxu0 %v1639
      %1748 = vmatmul.bf16.gmra.mxu0 %v1431
      %v1749 = vpop.f32.mrf.mxu0
      %v1750 = vadd.f32 %v1737, %v1749
      %v1751 = vpop.f32.mrf.mxu0
      %1752 = vdwg.mxu0
      %1753 = vmatpush.bf16.msra.mxu0 0
      %1754 = vmatpush.bf16.msra.mxu0 0
      %1755 = vmatpush.bf16.msra.mxu0 0
      %1756 = vmatpush.bf16.msra.mxu0 0
      %1757 = vmatpush.bf16.msra.mxu0 0
      %1758 = vmatpush.bf16.msra.mxu0 0
      %1759 = vmatpush.bf16.msra.mxu0 %v1666
      %1760 = vmatpush.bf16.msra.mxu0 %v1663
      %1761 = vmatmul.bf16.gmra.mxu0 %v1725
      %v1762 = vpop.f32.mrf.mxu0
      %v1763 = vadd.f32 %v1750, %v1762
      %v1764 = vpop.f32.mrf.mxu0
      %1765 = vdwg.mxu0
      %1766 = vmatpush.bf16.msra.mxu0 %v1637
      %1767 = vmatpush.bf16.msra.mxu0 %v1634
      %1768 = vmatpush.bf16.msra.mxu0 %v1631
      %1769 = vmatpush.bf16.msra.mxu0 %v1628
      %1770 = vmatpush.bf16.msra.mxu0 %v1625
      %1771 = vmatpush.bf16.msra.mxu0 %v1622
      %1772 = vmatpush.bf16.msra.mxu0 %v1619
      %1773 = vmatpush.bf16.msra.mxu0 %v1616
      %1774 = vmatmul.bf16.gmra.mxu0 %v1430
      %v1775 = vpop.f32.mrf.mxu0
      %v1776 = vadd.f32 0.0, %v1775
      %v1777 = vpop.f32.mrf.mxu0
      %1778 = vdwg.mxu0
      %1779 = vmatpush.bf16.msra.mxu0 %v1661
      %1780 = vmatpush.bf16.msra.mxu0 %v1658
      %1781 = vmatpush.bf16.msra.mxu0 %v1655
      %1782 = vmatpush.bf16.msra.mxu0 %v1652
      %1783 = vmatpush.bf16.msra.mxu0 %v1649
      %1784 = vmatpush.bf16.msra.mxu0 %v1646
      %1785 = vmatpush.bf16.msra.mxu0 %v1643
      %1786 = vmatpush.bf16.msra.mxu0 %v1640
      %1787 = vmatmul.bf16.gmra.mxu0 %v1431
      %v1788 = vpop.f32.mrf.mxu0
      %v1789 = vadd.f32 %v1776, %v1788
      %v1790 = vpop.f32.mrf.mxu0
      %1791 = vdwg.mxu0
      %1792 = vmatpush.bf16.msra.mxu0 0
      %1793 = vmatpush.bf16.msra.mxu0 0
      %1794 = vmatpush.bf16.msra.mxu0 0
      %1795 = vmatpush.bf16.msra.mxu0 0
      %1796 = vmatpush.bf16.msra.mxu0 0
      %1797 = vmatpush.bf16.msra.mxu0 0
      %1798 = vmatpush.bf16.msra.mxu0 %v1667
      %1799 = vmatpush.bf16.msra.mxu0 %v1664
      %1800 = vmatmul.bf16.gmra.mxu0 %v1725
      %v1801 = vpop.f32.mrf.mxu0
      %v1802 = vadd.f32 %v1789, %v1801
      %v1803 = vpop.f32.mrf.mxu0
      %1804 = vdwg.mxu0
      %1805 = vmatpush.bf16.msra.mxu0 %v1638
      %1806 = vmatpush.bf16.msra.mxu0 %v1635
      %1807 = vmatpush.bf16.msra.mxu0 %v1632
      %1808 = vmatpush.bf16.msra.mxu0 %v1629
      %1809 = vmatpush.bf16.msra.mxu0 %v1626
      %1810 = vmatpush.bf16.msra.mxu0 %v1623
      %1811 = vmatpush.bf16.msra.mxu0 %v1620
      %1812 = vmatpush.bf16.msra.mxu0 %v1617
      %1813 = vmatmul.bf16.gmra.mxu0 %v1430
      %v1814 = vpop.f32.mrf.mxu0
      %v1815 = vadd.f32 0.0, %v1814
      %v1816 = vpop.f32.mrf.mxu0
      %1817 = vdwg.mxu0
      %1818 = vmatpush.bf16.msra.mxu0 %v1662
      %1819 = vmatpush.bf16.msra.mxu0 %v1659
      %1820 = vmatpush.bf16.msra.mxu0 %v1656
      %1821 = vmatpush.bf16.msra.mxu0 %v1653
      %1822 = vmatpush.bf16.msra.mxu0 %v1650
      %1823 = vmatpush.bf16.msra.mxu0 %v1647
      %1824 = vmatpush.bf16.msra.mxu0 %v1644
      %1825 = vmatpush.bf16.msra.mxu0 %v1641
      %1826 = vmatmul.bf16.gmra.mxu0 %v1431
      %v1827 = vpop.f32.mrf.mxu0
      %v1828 = vadd.f32 %v1815, %v1827
      %v1829 = vpop.f32.mrf.mxu0
      %1830 = vdwg.mxu0
      %1831 = vmatpush.bf16.msra.mxu0 0
      %1832 = vmatpush.bf16.msra.mxu0 0
      %1833 = vmatpush.bf16.msra.mxu0 0
      %1834 = vmatpush.bf16.msra.mxu0 0
      %1835 = vmatpush.bf16.msra.mxu0 0
      %1836 = vmatpush.bf16.msra.mxu0 0
      %1837 = vmatpush.bf16.msra.mxu0 %v1668
      %1838 = vmatpush.bf16.msra.mxu0 %v1665
      %1839 = vmatmul.bf16.gmra.mxu0 %v1725
      %v1840 = vpop.f32.mrf.mxu0
      %v1841 = vadd.f32 %v1828, %v1840
      %v1842 = vpop.f32.mrf.mxu0
      %1843 = vdwg.mxu0
      %1845 = vst [vmem:[#allocation1] ss:$2 sm:$0xff] %v280
      %v1846 = vld.sshfl [vmem:[#allocation1] sm:$0xff pattern:$0x75316420]
      %v1847 = vld.sshfl [vmem:[#allocation1 + $0x8] sm:$0xff pattern:$0x75316420]
      %1850 = vst [vmem:[%s278] sm:$0xf] %v1846
      %1851 = vst [vmem:[%s278 + $0x8] sm:$0xf] %v1847
      %v1853 = vrot.slane %v1763, 4
      %vm1855 = vcmask 130052
      %1856 = vst.msk [vmem:[%s278] sm:$0xf0] %vm1855, %v1853
      %vm1857 = vcmask 125952
      %1858 = vst.msk [vmem:[%s278 + $0x10] sm:$0xf] %vm1857, %v1853
      %1859 = vrot.lane.b32.xlu0 %v1853, 126
      %v1860 = vpop.permute.xlu0 %1859
      %vm1862 = vcmask 261252
      %1863 = vst.msk [vmem:[%s278] sm:$0xf0] %vm1862, %v1860
      %vm1864 = vcmask 257152
      %1865 = vst.msk [vmem:[%s278 + $0x10] sm:$0xf] %vm1864, %v1860
      %1866 = vrot.lane.b32.xlu0 %v1853, 124
      %v1867 = vpop.permute.xlu0 %1866
      %vm1869 = vcmask 392452
      %1870 = vst.msk [vmem:[%s278] sm:$0xf0] %vm1869, %v1867
      %vm1871 = vcmask 388352
      %1872 = vst.msk [vmem:[%s278 + $0x10] sm:$0xf] %vm1871, %v1867
      %1873 = vrot.lane.b32.xlu0 %v1853, 122
      %v1874 = vpop.permute.xlu0 %1873
      %vm1876 = vcmask 523652
      %1877 = vst.msk [vmem:[%s278] sm:$0xf0] %vm1876, %v1874
      %vm1878 = vcmask 519552
      %1879 = vst.msk [vmem:[%s278 + $0x10] sm:$0xf] %vm1878, %v1874
      %1880 = vrot.lane.b32.xlu0 %v1853, 120
      %v1881 = vpop.permute.xlu0 %1880
      %vm1883 = vcmask 654852
      %1884 = vst.msk [vmem:[%s278] sm:$0xf0] %vm1883, %v1881
      %vm1885 = vcmask 650752
      %1886 = vst.msk [vmem:[%s278 + $0x10] sm:$0xf] %vm1885, %v1881
      %1887 = vrot.lane.b32.xlu0 %v1853, 118
      %v1888 = vpop.permute.xlu0 %1887
      %vm1890 = vcmask 786052
      %1891 = vst.msk [vmem:[%s278] sm:$0xf0] %vm1890, %v1888
      %vm1892 = vcmask 781952
      %1893 = vst.msk [vmem:[%s278 + $0x10] sm:$0xf] %vm1892, %v1888
      %1894 = vrot.lane.b32.xlu0 %v1853, 116
      %v1895 = vpop.permute.xlu0 %1894
      %vm1897 = vcmask 917252
      %1898 = vst.msk [vmem:[%s278] sm:$0xf0] %vm1897, %v1895
      %vm1899 = vcmask 913152
      %1900 = vst.msk [vmem:[%s278 + $0x10] sm:$0xf] %vm1899, %v1895
      %v1902 = vrot.slane %v1802, 4
      %1903 = vrot.lane.b32.xlu0 %v1853, 114
      %v1904 = vpop.permute.xlu0 %1903
      %1905 = vrot.lane.b32.xlu0 %v1902, 114
      %v1906 = vpop.permute.xlu0 %1905
      %vm1907 = vcmask 932864
      %v1908 = vsel %vm1907, %v1904, %v1906
      %vm1910 = vcmask 1048452
      %1911 = vst.msk [vmem:[%s278] sm:$0xf0] %vm1910, %v1908
      %vm1912 = vcmask 1044352
      %1913 = vst.msk [vmem:[%s278 + $0x10] sm:$0xf] %vm1912, %v1908
      %1914 = vrot.lane.b32.xlu0 %v1902, 112
      %v1915 = vpop.permute.xlu0 %1914
      %1917 = vst.msk [vmem:[%s278 + $0x8] sm:$0xf0] %vm1855, %v1915
      %1918 = vst.msk [vmem:[%s278 + $0x18] sm:$0xf] %vm1857, %v1915
      %1919 = vrot.lane.b32.xlu0 %v1902, 110
      %v1920 = vpop.permute.xlu0 %1919
      %1922 = vst.msk [vmem:[%s278 + $0x8] sm:$0xf0] %vm1862, %v1920
      %1923 = vst.msk [vmem:[%s278 + $0x18] sm:$0xf] %vm1864, %v1920
      %1924 = vrot.lane.b32.xlu0 %v1902, 108
      %v1925 = vpop.permute.xlu0 %1924
      %1927 = vst.msk [vmem:[%s278 + $0x8] sm:$0xf0] %vm1869, %v1925
      %1928 = vst.msk [vmem:[%s278 + $0x18] sm:$0xf] %vm1871, %v1925
      %1929 = vrot.lane.b32.xlu0 %v1902, 106
      %v1930 = vpop.permute.xlu0 %1929
      %1932 = vst.msk [vmem:[%s278 + $0x8] sm:$0xf0] %vm1876, %v1930
      %1933 = vst.msk [vmem:[%s278 + $0x18] sm:$0xf] %vm1878, %v1930
      %1934 = vrot.lane.b32.xlu0 %v1902, 104
      %v1935 = vpop.permute.xlu0 %1934
      %1937 = vst.msk [vmem:[%s278 + $0x8] sm:$0xf0] %vm1883, %v1935
      %1938 = vst.msk [vmem:[%s278 + $0x18] sm:$0xf] %vm1885, %v1935
      %1939 = vrot.lane.b32.xlu0 %v1902, 102
      %v1940 = vpop.permute.xlu0 %1939
      %1942 = vst.msk [vmem:[%s278 + $0x8] sm:$0xf0] %vm1890, %v1940
      %1943 = vst.msk [vmem:[%s278 + $0x18] sm:$0xf] %vm1892, %v1940
      %v1945 = vrot.slane %v1841, 4
      %1946 = vrot.lane.b32.xlu0 %v1902, 100
      %v1947 = vpop.permute.xlu0 %1946
      %1948 = vrot.lane.b32.xlu0 %v1945, 100
      %v1949 = vpop.permute.xlu0 %1948
      %vm1950 = vcmask 818176
      %v1951 = vsel %vm1950, %v1947, %v1949
      %1953 = vst.msk [vmem:[%s278 + $0x8] sm:$0xf0] %vm1897, %v1951
      %1954 = vst.msk [vmem:[%s278 + $0x18] sm:$0xf] %vm1899, %v1951
      %1955 = vrot.lane.b32.xlu0 %v1945, 98
      %v1956 = vpop.permute.xlu0 %1955
      %1958 = vst.msk [vmem:[%s278 + $0x8] sm:$0xf0] %vm1910, %v1956
      %1959 = vst.msk [vmem:[%s278 + $0x18] sm:$0xf] %vm1912, %v1956
      %p1960 = scmp.lt.s32.totalorder %s18, 1
      %s1961 = scalar_select %p1960, %s18, 1
      %s1962 = smul.addr %s1961, 4
      %s1963 = smul.addr %s1962, 8
      %s1964 = scalar_lea.vmem %s7, %s1963
      // Predicated region
      $region49: #{bottleneck_forward.3} parent=47 // pred_check
        %p1965 = pneg %p188
      $region50: #{bottleneck_forward.3} parent=47 // pred_check_branch
        %1967 = sbr.rel (%p1965) target = $region52
      $region51: #{bottleneck_forward.3} parent=47 // pred_region
        _
      $region52: #{bottleneck_forward.3} parent=47 // pred_fallthru
        _
    $region48: #{bottleneck_forward.3} parent=5 // pred_fallthru
      _
    %p1968 = scmp.le.s32.totalorder 2, %s13
    // Predicated region
    $region53: #{bottleneck_forward.3} parent=5 // pred_check
      %p1969 = pneg %p1968
    $region54: #{bottleneck_forward.3} parent=5 // pred_check_branch
      %1971 = sbr.rel (%p1969) target = $region56
    $region55: #{bottleneck_forward.3} parent=5 // pred_region
      %s1972 = ssub.s32 %s13, 2
      // Predicated region
      $region57: #{bottleneck_forward.3} parent=55 // pred_check
        %p1973 = pneg %p194
      $region58: #{bottleneck_forward.3} parent=55 // pred_check_branch
        %1975 = sbr.rel (%p1973) target = $region60
      $region59: #{bottleneck_forward.3} parent=55 // pred_region
        %p1976 = scmp.lt.s32.totalorder %s19, 1
        %s1977 = scalar_select %p1976, %s19, 1
        %s1978 = smul.addr %s1977, 4
        %s1979 = smul.addr %s1978, 8
        %s1980 = scalar_lea.vmem %s7, %s1979
      $region60: #{bottleneck_forward.3} parent=55 // pred_fallthru
        _
    $region56: #{bottleneck_forward.3} parent=5 // pred_fallthru
      _
  $region6: #{bottleneck_forward.3} parent=0 // loop_footer
    %s17 = sadd.s32 1, %s13
  $region7: #{bottleneck_forward.3} parent=0 // loop_footer_branch
    %12 = sbr.rel target = $region3
  $region8: #{bottleneck_forward.3} parent=0 // loop_exit
    _

</llo_original>
